<compile_context>
chip_gen: v7x
topology: tpu7x:2x2x1
jax: 0.10.0
libtpu: 0.0.40
codegen_flags: <defaults>
</compile_context>

<pallas_src>
import functools

import jax
import jax.numpy as jnp
from jax.experimental import pallas as pl
from jax.experimental.pallas import tpu as pltpu


CHUNK = 128      # lane-chunk width kept resident in vregs across the layer loop
LOG_GROUP = 2    # layers per jnp.log() call in the log-det accumulation


def layered_planar_flow_kernel(b_ref, uw_ref, w_ref, uhat_ref, z_ref, x_ref, ld_ref):
    """One grid step == the full L-layer flow applied to one (D, TILE_N) tile."""
    D, L = w_ref.shape
    tile = z_ref.shape[1]
    n_chunks = tile // CHUNK

    # Per-layer parameter columns / scalars, hoisted out of the chunk loop.
    w_all = w_ref[...]                                        # (D, L) f32
    uhat_all = uhat_ref[...]                                  # (D, L) f32
    w_cols = [w_all[:, l:l + 1] for l in range(L)]            # (D, 1) each
    uhat_cols = [uhat_all[:, l:l + 1] for l in range(L)]      # (D, 1) each
    b_vals = [b_ref[l] for l in range(L)]                     # SMEM scalars
    uw_vals = [uw_ref[l] for l in range(L)]                   # SMEM scalars

    @pl.loop(0, n_chunks)
    def _(c):
        start = pl.multiple_of(c * CHUNK, CHUNK)
        cols = pl.ds(start, CHUNK)

        z = z_ref[:, cols].astype(jnp.float32)                # (D, CHUNK): 4 vregs
        ld = jnp.zeros((1, CHUNK), jnp.float32)               # lane-dense log-det row
        fac = None
        for l in range(L):                                    # static unroll over layers
            # hidden = w . z + b : VPU mul + cheap sublane reduce -> full-lane row
            hidden = jnp.sum(z * w_cols[l], axis=0, keepdims=True) + b_vals[l]
            h = jnp.tanh(hidden)                              # (1, CHUNK), full-lane EUP
            z = z + uhat_cols[l] * h                          # (D, CHUNK), stays in vregs
            h_prime = 1.0 - h * h
            factor = jnp.abs(1.0 + uw_vals[l] * h_prime) + 1e-15
            fac = factor if fac is None else fac * factor
            if (l % LOG_GROUP == LOG_GROUP - 1) or (l == L - 1):
                ld = ld + jnp.log(fac)                        # one EUP log per group
                fac = None

        x_ref[:, cols] = z.astype(x_ref.dtype)                # lane-dense store
        ld_ref[:, cols] = ld                                  # lane-dense store


def _round_up(x, m):
    return ((x + m - 1) // m) * m


@functools.partial(jax.jit, static_argnames=("tile_n",))
def layered_planar_flow(z, u, w, b, *, tile_n=4096):
    """z: (N, D); u, w: (L, D); b: (L, 1).  Returns (x:(N, D), log_det_sum:(N,))."""
    N, D = z.shape
    L = u.shape[0]

    # ---- parameter-only math, hoisted out of the kernel (grid-invariant) ----
    u32 = u.astype(jnp.float32)
    w32 = w.astype(jnp.float32)
    wu = jnp.sum(w32 * u32, axis=-1, keepdims=True)                 # (L, 1)
    w_norm_sq = jnp.sum(w32 * w32, axis=-1, keepdims=True)          # (L, 1)
    # m(wu) = -1 + softplus(wu)  (stable form with log1p)
    m_wu = -1.0 + jnp.maximum(wu, 0.0) + jnp.log1p(jnp.exp(-jnp.abs(wu)))
    u_hat = u32 + (m_wu - wu) * (w32 / (w_norm_sq + 1e-15))         # (L, D)
    uw = jnp.sum(u_hat * w32, axis=-1)                              # (L,)
    b_flat = jnp.reshape(b, (L,)).astype(jnp.float32)

    # ---- lane-dense (D, N) layout: tile the lane (batch) axis ----
    n_min = _round_up(max(N, 1), CHUNK)
    tile = min(_round_up(tile_n, CHUNK), n_min)
    # v7x has 2 TensorCores; if the whole batch fits in one tile, split it so
    # the "parallel" grid axis has >= 2 tiles and both cores get work.
    if n_min >= 2 * CHUNK and tile >= n_min:
        tile = _round_up(n_min // 2, CHUNK)
    n_pad = _round_up(N, tile)

    z_t = jnp.transpose(z)                                          # (D, N)
    if n_pad != N:
        z_t = jnp.pad(z_t, ((0, 0), (0, n_pad - N)))

    x_t, ld_row = pl.pallas_call(
        layered_planar_flow_kernel,
        out_shape=(
            jax.ShapeDtypeStruct((D, n_pad), z.dtype),
            jax.ShapeDtypeStruct((1, n_pad), jnp.float32),
        ),
        grid_spec=pltpu.PrefetchScalarGridSpec(
            num_scalar_prefetch=0,
            grid=(n_pad // tile,),
            in_specs=[
                pl.BlockSpec(memory_space=pltpu.MemorySpace.SMEM),   # b   (L,)
                pl.BlockSpec(memory_space=pltpu.MemorySpace.SMEM),   # u^.w (L,)
                pl.BlockSpec((D, L), lambda i: (0, 0)),              # w^T   (D, L)
                pl.BlockSpec((D, L), lambda i: (0, 0)),              # u_hat^T (D, L)
                pl.BlockSpec((D, tile), lambda i: (0, i)),           # z^T batch tile
            ],
            out_specs=[
                pl.BlockSpec((D, tile), lambda i: (0, i)),           # x^T batch tile
                pl.BlockSpec((1, tile), lambda i: (0, i)),           # log-det row
            ],
        ),
        compiler_params=pltpu.CompilerParams(
            dimension_semantics=("parallel",)),                      # megacore on v7x
    )(b_flat, uw, jnp.transpose(w32), jnp.transpose(u_hat), z_t)

    return jnp.transpose(x_t[:, :N]), ld_row[0, :N]


def layered_planar_flow_ref(z, u, w, b):
    """Pure-JAX reference mirroring the PyTorch module's forward()."""
    log_det_sum = jnp.zeros((z.shape[0],), jnp.float32)
    for l in range(u.shape[0]):
        ul, wl, bl = u[l], w[l], b[l, 0]
        wu = jnp.dot(wl, ul)
        m_wu = -1.0 + jnp.maximum(wu, 0.0) + jnp.log1p(jnp.exp(-jnp.abs(wu)))
        u_hat = ul + (m_wu - wu) * (wl / (jnp.sum(wl * wl) + 1e-15))
        hidden = z @ wl + bl                                 # (N,)
        h = jnp.tanh(hidden)
        z = z + u_hat[None, :] * h[:, None]
        h_prime = 1.0 - h * h
        log_det_sum = log_det_sum + jnp.log(
            jnp.abs(1.0 + jnp.dot(u_hat, wl) * h_prime) + 1e-15)
    return z, log_det_sum


if __name__ == "__main__":
    DATA_DIM = 32
    FLOW_LENGTH = 16
    BATCH = 8

    key = jax.random.PRNGKey(0)
    kz, ku, kw, kb, kz2 = jax.random.split(key, 5)
    scale = 1.0 / jnp.sqrt(jnp.float32(DATA_DIM))

    # Deterministic synthetic parameters (matching torch.rand(...)/sqrt(D) shapes).
    u = jax.random.uniform(ku, (FLOW_LENGTH, DATA_DIM), jnp.float32) * scale
    w = jax.random.uniform(kw, (FLOW_LENGTH, DATA_DIM), jnp.float32) * scale
    b = jax.random.uniform(kb, (FLOW_LENGTH, 1), jnp.float32) * scale
    z = jax.random.normal(kz, (BATCH, DATA_DIM), jnp.float32)

    # Small-batch path (single tile, single grid step, single lane chunk).
    x, log_det = layered_planar_flow(z, u, w, b)
    jax.block_until_ready((x, log_det))
    x_ref, ld_ref = layered_planar_flow_ref(z, u, w, b)
    assert x.shape == (BATCH, DATA_DIM) and log_det.shape == (BATCH,)
    assert jnp.allclose(x, x_ref, rtol=1e-4, atol=1e-4)
    assert jnp.allclose(log_det, ld_ref, rtol=1e-4, atol=1e-4)

    # Padding + tile-split (2 grid tiles for megacore) + multi-chunk pl.loop path.
    N2 = 300
    z2 = jax.random.normal(kz2, (N2, DATA_DIM), jnp.float32)
    x2, ld2 = layered_planar_flow(z2, u, w, b)
    jax.block_until_ready((x2, ld2))
    x2_ref, ld2_ref = layered_planar_flow_ref(z2, u, w, b)
    assert x2.shape == (N2, DATA_DIM) and ld2.shape == (N2,)
    assert jnp.allclose(x2, x2_ref, rtol=1e-4, atol=1e-4)
    assert jnp.allclose(ld2, ld2_ref, rtol=1e-4, atol=1e-4)

    print("KERNEL_OK")
</pallas_src>

<mosaic_0001>
module attributes {stable_mosaic.version = 11 : i64} {
  func.func @layered_planar_flow_kernel(%arg0: i32, %arg1: memref<16xf32, #tpu.memory_space<smem>>, %arg2: memref<16xf32, #tpu.memory_space<smem>>, %arg3: memref<32x16xf32, #tpu.memory_space<vmem>>, %arg4: memref<32x16xf32, #tpu.memory_space<vmem>>, %arg5: memref<32x128xf32, #tpu.memory_space<vmem>>, %arg6: memref<32x128xf32, #tpu.memory_space<vmem>>, %arg7: memref<1x128xf32, #tpu.memory_space<vmem>>) attributes {dimension_semantics = [#tpu.dimension_semantics<parallel>], iteration_bounds = array<i64: 1>, scalar_prefetch = 0 : i64, scratch_operands = 0 : i64, tpu.core_type = #tpu.core_type<tc>, window_params = [{transform_indices = @transform_0, window_bounds = array<i64: 16>}, {transform_indices = @transform_1, window_bounds = array<i64: 16>}, {pipeline_mode = #tpu.pipeline_mode<synchronous>, transform_indices = @transform_2, window_bounds = array<i64: 32, 16>}, {pipeline_mode = #tpu.pipeline_mode<synchronous>, transform_indices = @transform_3, window_bounds = array<i64: 32, 16>}, {transform_indices = @transform_4, window_bounds = array<i64: 32, 128>}, {transform_indices = @transform_5, window_bounds = array<i64: 32, 128>}, {transform_indices = @transform_6, window_bounds = array<i64: 1, 128>}]} {
    %c0 = arith.constant 0 : index
    %c0_0 = arith.constant 0 : index
    %0 = vector.load %arg3[%c0, %c0_0] : memref<32x16xf32, #tpu.memory_space<vmem>>, vector<32x16xf32>
    %c0_1 = arith.constant 0 : index
    %c0_2 = arith.constant 0 : index
    %1 = vector.load %arg4[%c0_1, %c0_2] : memref<32x16xf32, #tpu.memory_space<vmem>>, vector<32x16xf32>
    %2 = vector.extract_strided_slice %0 {offsets = [0, 0], sizes = [32, 1], strides = [1, 1]} : vector<32x16xf32> to vector<32x1xf32>
    %3 = vector.extract_strided_slice %0 {offsets = [0, 1], sizes = [32, 1], strides = [1, 1]} : vector<32x16xf32> to vector<32x1xf32>
    %4 = vector.extract_strided_slice %0 {offsets = [0, 2], sizes = [32, 1], strides = [1, 1]} : vector<32x16xf32> to vector<32x1xf32>
    %5 = vector.extract_strided_slice %0 {offsets = [0, 3], sizes = [32, 1], strides = [1, 1]} : vector<32x16xf32> to vector<32x1xf32>
    %6 = vector.extract_strided_slice %0 {offsets = [0, 4], sizes = [32, 1], strides = [1, 1]} : vector<32x16xf32> to vector<32x1xf32>
    %7 = vector.extract_strided_slice %0 {offsets = [0, 5], sizes = [32, 1], strides = [1, 1]} : vector<32x16xf32> to vector<32x1xf32>
    %8 = vector.extract_strided_slice %0 {offsets = [0, 6], sizes = [32, 1], strides = [1, 1]} : vector<32x16xf32> to vector<32x1xf32>
    %9 = vector.extract_strided_slice %0 {offsets = [0, 7], sizes = [32, 1], strides = [1, 1]} : vector<32x16xf32> to vector<32x1xf32>
    %10 = vector.extract_strided_slice %0 {offsets = [0, 8], sizes = [32, 1], strides = [1, 1]} : vector<32x16xf32> to vector<32x1xf32>
    %11 = vector.extract_strided_slice %0 {offsets = [0, 9], sizes = [32, 1], strides = [1, 1]} : vector<32x16xf32> to vector<32x1xf32>
    %12 = vector.extract_strided_slice %0 {offsets = [0, 10], sizes = [32, 1], strides = [1, 1]} : vector<32x16xf32> to vector<32x1xf32>
    %13 = vector.extract_strided_slice %0 {offsets = [0, 11], sizes = [32, 1], strides = [1, 1]} : vector<32x16xf32> to vector<32x1xf32>
    %14 = vector.extract_strided_slice %0 {offsets = [0, 12], sizes = [32, 1], strides = [1, 1]} : vector<32x16xf32> to vector<32x1xf32>
    %15 = vector.extract_strided_slice %0 {offsets = [0, 13], sizes = [32, 1], strides = [1, 1]} : vector<32x16xf32> to vector<32x1xf32>
    %16 = vector.extract_strided_slice %0 {offsets = [0, 14], sizes = [32, 1], strides = [1, 1]} : vector<32x16xf32> to vector<32x1xf32>
    %17 = vector.extract_strided_slice %0 {offsets = [0, 15], sizes = [32, 1], strides = [1, 1]} : vector<32x16xf32> to vector<32x1xf32>
    %18 = vector.extract_strided_slice %1 {offsets = [0, 0], sizes = [32, 1], strides = [1, 1]} : vector<32x16xf32> to vector<32x1xf32>
    %19 = vector.extract_strided_slice %1 {offsets = [0, 1], sizes = [32, 1], strides = [1, 1]} : vector<32x16xf32> to vector<32x1xf32>
    %20 = vector.extract_strided_slice %1 {offsets = [0, 2], sizes = [32, 1], strides = [1, 1]} : vector<32x16xf32> to vector<32x1xf32>
    %21 = vector.extract_strided_slice %1 {offsets = [0, 3], sizes = [32, 1], strides = [1, 1]} : vector<32x16xf32> to vector<32x1xf32>
    %22 = vector.extract_strided_slice %1 {offsets = [0, 4], sizes = [32, 1], strides = [1, 1]} : vector<32x16xf32> to vector<32x1xf32>
    %23 = vector.extract_strided_slice %1 {offsets = [0, 5], sizes = [32, 1], strides = [1, 1]} : vector<32x16xf32> to vector<32x1xf32>
    %24 = vector.extract_strided_slice %1 {offsets = [0, 6], sizes = [32, 1], strides = [1, 1]} : vector<32x16xf32> to vector<32x1xf32>
    %25 = vector.extract_strided_slice %1 {offsets = [0, 7], sizes = [32, 1], strides = [1, 1]} : vector<32x16xf32> to vector<32x1xf32>
    %26 = vector.extract_strided_slice %1 {offsets = [0, 8], sizes = [32, 1], strides = [1, 1]} : vector<32x16xf32> to vector<32x1xf32>
    %27 = vector.extract_strided_slice %1 {offsets = [0, 9], sizes = [32, 1], strides = [1, 1]} : vector<32x16xf32> to vector<32x1xf32>
    %28 = vector.extract_strided_slice %1 {offsets = [0, 10], sizes = [32, 1], strides = [1, 1]} : vector<32x16xf32> to vector<32x1xf32>
    %29 = vector.extract_strided_slice %1 {offsets = [0, 11], sizes = [32, 1], strides = [1, 1]} : vector<32x16xf32> to vector<32x1xf32>
    %30 = vector.extract_strided_slice %1 {offsets = [0, 12], sizes = [32, 1], strides = [1, 1]} : vector<32x16xf32> to vector<32x1xf32>
    %31 = vector.extract_strided_slice %1 {offsets = [0, 13], sizes = [32, 1], strides = [1, 1]} : vector<32x16xf32> to vector<32x1xf32>
    %32 = vector.extract_strided_slice %1 {offsets = [0, 14], sizes = [32, 1], strides = [1, 1]} : vector<32x16xf32> to vector<32x1xf32>
    %33 = vector.extract_strided_slice %1 {offsets = [0, 15], sizes = [32, 1], strides = [1, 1]} : vector<32x16xf32> to vector<32x1xf32>
    %c0_3 = arith.constant 0 : index
    %34 = memref.load %arg1[%c0_3] : memref<16xf32, #tpu.memory_space<smem>>
    %c1 = arith.constant 1 : index
    %35 = memref.load %arg1[%c1] : memref<16xf32, #tpu.memory_space<smem>>
    %c2 = arith.constant 2 : index
    %36 = memref.load %arg1[%c2] : memref<16xf32, #tpu.memory_space<smem>>
    %c3 = arith.constant 3 : index
    %37 = memref.load %arg1[%c3] : memref<16xf32, #tpu.memory_space<smem>>
    %c4 = arith.constant 4 : index
    %38 = memref.load %arg1[%c4] : memref<16xf32, #tpu.memory_space<smem>>
    %c5 = arith.constant 5 : index
    %39 = memref.load %arg1[%c5] : memref<16xf32, #tpu.memory_space<smem>>
    %c6 = arith.constant 6 : index
    %40 = memref.load %arg1[%c6] : memref<16xf32, #tpu.memory_space<smem>>
    %c7 = arith.constant 7 : index
    %41 = memref.load %arg1[%c7] : memref<16xf32, #tpu.memory_space<smem>>
    %c8 = arith.constant 8 : index
    %42 = memref.load %arg1[%c8] : memref<16xf32, #tpu.memory_space<smem>>
    %c9 = arith.constant 9 : index
    %43 = memref.load %arg1[%c9] : memref<16xf32, #tpu.memory_space<smem>>
    %c10 = arith.constant 10 : index
    %44 = memref.load %arg1[%c10] : memref<16xf32, #tpu.memory_space<smem>>
    %c11 = arith.constant 11 : index
    %45 = memref.load %arg1[%c11] : memref<16xf32, #tpu.memory_space<smem>>
    %c12 = arith.constant 12 : index
    %46 = memref.load %arg1[%c12] : memref<16xf32, #tpu.memory_space<smem>>
    %c13 = arith.constant 13 : index
    %47 = memref.load %arg1[%c13] : memref<16xf32, #tpu.memory_space<smem>>
    %c14 = arith.constant 14 : index
    %48 = memref.load %arg1[%c14] : memref<16xf32, #tpu.memory_space<smem>>
    %c15 = arith.constant 15 : index
    %49 = memref.load %arg1[%c15] : memref<16xf32, #tpu.memory_space<smem>>
    %c0_4 = arith.constant 0 : index
    %50 = memref.load %arg2[%c0_4] : memref<16xf32, #tpu.memory_space<smem>>
    %c1_5 = arith.constant 1 : index
    %51 = memref.load %arg2[%c1_5] : memref<16xf32, #tpu.memory_space<smem>>
    %c2_6 = arith.constant 2 : index
    %52 = memref.load %arg2[%c2_6] : memref<16xf32, #tpu.memory_space<smem>>
    %c3_7 = arith.constant 3 : index
    %53 = memref.load %arg2[%c3_7] : memref<16xf32, #tpu.memory_space<smem>>
    %c4_8 = arith.constant 4 : index
    %54 = memref.load %arg2[%c4_8] : memref<16xf32, #tpu.memory_space<smem>>
    %c5_9 = arith.constant 5 : index
    %55 = memref.load %arg2[%c5_9] : memref<16xf32, #tpu.memory_space<smem>>
    %c6_10 = arith.constant 6 : index
    %56 = memref.load %arg2[%c6_10] : memref<16xf32, #tpu.memory_space<smem>>
    %c7_11 = arith.constant 7 : index
    %57 = memref.load %arg2[%c7_11] : memref<16xf32, #tpu.memory_space<smem>>
    %c8_12 = arith.constant 8 : index
    %58 = memref.load %arg2[%c8_12] : memref<16xf32, #tpu.memory_space<smem>>
    %c9_13 = arith.constant 9 : index
    %59 = memref.load %arg2[%c9_13] : memref<16xf32, #tpu.memory_space<smem>>
    %c10_14 = arith.constant 10 : index
    %60 = memref.load %arg2[%c10_14] : memref<16xf32, #tpu.memory_space<smem>>
    %c11_15 = arith.constant 11 : index
    %61 = memref.load %arg2[%c11_15] : memref<16xf32, #tpu.memory_space<smem>>
    %c12_16 = arith.constant 12 : index
    %62 = memref.load %arg2[%c12_16] : memref<16xf32, #tpu.memory_space<smem>>
    %c13_17 = arith.constant 13 : index
    %63 = memref.load %arg2[%c13_17] : memref<16xf32, #tpu.memory_space<smem>>
    %c14_18 = arith.constant 14 : index
    %64 = memref.load %arg2[%c14_18] : memref<16xf32, #tpu.memory_space<smem>>
    %c15_19 = arith.constant 15 : index
    %65 = memref.load %arg2[%c15_19] : memref<16xf32, #tpu.memory_space<smem>>
    %c0_i32 = arith.constant 0 : i32
    %c1_i32 = arith.constant 1 : i32
    %66 = arith.muli %c0_i32, %c1_i32 : i32
    %c0_i32_20 = arith.constant 0 : i32
    %67 = arith.addi %c0_i32_20, %66 : i32
    %c128_i32 = arith.constant 128 : i32
    %68 = arith.muli %67, %c128_i32 : i32
    %69 = tpu.assume_multiple %68, 128 : i32
    %c0_21 = arith.constant 0 : index
    %70 = arith.index_cast %69 : i32 to index
    %71 = vector.load %arg5[%c0_21, %70] : memref<32x128xf32, #tpu.memory_space<vmem>>, vector<32x128xf32>
    %cst = arith.constant 0.000000e+00 : f32
    %72 = vector.broadcast %cst : f32 to vector<1x128xf32>
    %73 = vector.broadcast %2 : vector<32x1xf32> to vector<32x128xf32>
    %74 = arith.mulf %71, %73 : vector<32x128xf32>
    %cst_22 = arith.constant dense<0.000000e+00> : vector<128xf32>
    %75 = vector.multi_reduction <add>, %74, %cst_22 [0] : vector<32x128xf32> to vector<128xf32>
    %76 = vector.shape_cast %75 : vector<128xf32> to vector<1x128xf32>
    %77 = vector.broadcast %34 : f32 to vector<1x128xf32>
    %78 = arith.addf %76, %77 : vector<1x128xf32>
    %79 = math.tanh %78 : vector<1x128xf32>
    %80 = vector.broadcast %18 : vector<32x1xf32> to vector<32x128xf32>
    %81 = vector.broadcast %79 : vector<1x128xf32> to vector<32x128xf32>
    %82 = arith.mulf %80, %81 : vector<32x128xf32>
    %83 = arith.addf %71, %82 : vector<32x128xf32>
    %84 = arith.mulf %79, %79 : vector<1x128xf32>
    %cst_23 = arith.constant 1.000000e+00 : f32
    %85 = vector.broadcast %cst_23 : f32 to vector<1x128xf32>
    %86 = arith.subf %85, %84 : vector<1x128xf32>
    %87 = vector.broadcast %50 : f32 to vector<1x128xf32>
    %88 = arith.mulf %87, %86 : vector<1x128xf32>
    %cst_24 = arith.constant 1.000000e+00 : f32
    %89 = vector.broadcast %cst_24 : f32 to vector<1x128xf32>
    %90 = arith.addf %89, %88 : vector<1x128xf32>
    %91 = math.absf %90 : vector<1x128xf32>
    %cst_25 = arith.constant 1.000000e-15 : f32
    %92 = vector.broadcast %cst_25 : f32 to vector<1x128xf32>
    %93 = arith.addf %91, %92 : vector<1x128xf32>
    %94 = vector.broadcast %3 : vector<32x1xf32> to vector<32x128xf32>
    %95 = arith.mulf %83, %94 : vector<32x128xf32>
    %cst_26 = arith.constant dense<0.000000e+00> : vector<128xf32>
    %96 = vector.multi_reduction <add>, %95, %cst_26 [0] : vector<32x128xf32> to vector<128xf32>
    %97 = vector.shape_cast %96 : vector<128xf32> to vector<1x128xf32>
    %98 = vector.broadcast %35 : f32 to vector<1x128xf32>
    %99 = arith.addf %97, %98 : vector<1x128xf32>
    %100 = math.tanh %99 : vector<1x128xf32>
    %101 = vector.broadcast %19 : vector<32x1xf32> to vector<32x128xf32>
    %102 = vector.broadcast %100 : vector<1x128xf32> to vector<32x128xf32>
    %103 = arith.mulf %101, %102 : vector<32x128xf32>
    %104 = arith.addf %83, %103 : vector<32x128xf32>
    %105 = arith.mulf %100, %100 : vector<1x128xf32>
    %cst_27 = arith.constant 1.000000e+00 : f32
    %106 = vector.broadcast %cst_27 : f32 to vector<1x128xf32>
    %107 = arith.subf %106, %105 : vector<1x128xf32>
    %108 = vector.broadcast %51 : f32 to vector<1x128xf32>
    %109 = arith.mulf %108, %107 : vector<1x128xf32>
    %cst_28 = arith.constant 1.000000e+00 : f32
    %110 = vector.broadcast %cst_28 : f32 to vector<1x128xf32>
    %111 = arith.addf %110, %109 : vector<1x128xf32>
    %112 = math.absf %111 : vector<1x128xf32>
    %cst_29 = arith.constant 1.000000e-15 : f32
    %113 = vector.broadcast %cst_29 : f32 to vector<1x128xf32>
    %114 = arith.addf %112, %113 : vector<1x128xf32>
    %115 = arith.mulf %93, %114 : vector<1x128xf32>
    %116 = math.log %115 : vector<1x128xf32>
    %117 = arith.addf %72, %116 : vector<1x128xf32>
    %118 = vector.broadcast %4 : vector<32x1xf32> to vector<32x128xf32>
    %119 = arith.mulf %104, %118 : vector<32x128xf32>
    %cst_30 = arith.constant dense<0.000000e+00> : vector<128xf32>
    %120 = vector.multi_reduction <add>, %119, %cst_30 [0] : vector<32x128xf32> to vector<128xf32>
    %121 = vector.shape_cast %120 : vector<128xf32> to vector<1x128xf32>
    %122 = vector.broadcast %36 : f32 to vector<1x128xf32>
    %123 = arith.addf %121, %122 : vector<1x128xf32>
    %124 = math.tanh %123 : vector<1x128xf32>
    %125 = vector.broadcast %20 : vector<32x1xf32> to vector<32x128xf32>
    %126 = vector.broadcast %124 : vector<1x128xf32> to vector<32x128xf32>
    %127 = arith.mulf %125, %126 : vector<32x128xf32>
    %128 = arith.addf %104, %127 : vector<32x128xf32>
    %129 = arith.mulf %124, %124 : vector<1x128xf32>
    %cst_31 = arith.constant 1.000000e+00 : f32
    %130 = vector.broadcast %cst_31 : f32 to vector<1x128xf32>
    %131 = arith.subf %130, %129 : vector<1x128xf32>
    %132 = vector.broadcast %52 : f32 to vector<1x128xf32>
    %133 = arith.mulf %132, %131 : vector<1x128xf32>
    %cst_32 = arith.constant 1.000000e+00 : f32
    %134 = vector.broadcast %cst_32 : f32 to vector<1x128xf32>
    %135 = arith.addf %134, %133 : vector<1x128xf32>
    %136 = math.absf %135 : vector<1x128xf32>
    %cst_33 = arith.constant 1.000000e-15 : f32
    %137 = vector.broadcast %cst_33 : f32 to vector<1x128xf32>
    %138 = arith.addf %136, %137 : vector<1x128xf32>
    %139 = vector.broadcast %5 : vector<32x1xf32> to vector<32x128xf32>
    %140 = arith.mulf %128, %139 : vector<32x128xf32>
    %cst_34 = arith.constant dense<0.000000e+00> : vector<128xf32>
    %141 = vector.multi_reduction <add>, %140, %cst_34 [0] : vector<32x128xf32> to vector<128xf32>
    %142 = vector.shape_cast %141 : vector<128xf32> to vector<1x128xf32>
    %143 = vector.broadcast %37 : f32 to vector<1x128xf32>
    %144 = arith.addf %142, %143 : vector<1x128xf32>
    %145 = math.tanh %144 : vector<1x128xf32>
    %146 = vector.broadcast %21 : vector<32x1xf32> to vector<32x128xf32>
    %147 = vector.broadcast %145 : vector<1x128xf32> to vector<32x128xf32>
    %148 = arith.mulf %146, %147 : vector<32x128xf32>
    %149 = arith.addf %128, %148 : vector<32x128xf32>
    %150 = arith.mulf %145, %145 : vector<1x128xf32>
    %cst_35 = arith.constant 1.000000e+00 : f32
    %151 = vector.broadcast %cst_35 : f32 to vector<1x128xf32>
    %152 = arith.subf %151, %150 : vector<1x128xf32>
    %153 = vector.broadcast %53 : f32 to vector<1x128xf32>
    %154 = arith.mulf %153, %152 : vector<1x128xf32>
    %cst_36 = arith.constant 1.000000e+00 : f32
    %155 = vector.broadcast %cst_36 : f32 to vector<1x128xf32>
    %156 = arith.addf %155, %154 : vector<1x128xf32>
    %157 = math.absf %156 : vector<1x128xf32>
    %cst_37 = arith.constant 1.000000e-15 : f32
    %158 = vector.broadcast %cst_37 : f32 to vector<1x128xf32>
    %159 = arith.addf %157, %158 : vector<1x128xf32>
    %160 = arith.mulf %138, %159 : vector<1x128xf32>
    %161 = math.log %160 : vector<1x128xf32>
    %162 = arith.addf %117, %161 : vector<1x128xf32>
    %163 = vector.broadcast %6 : vector<32x1xf32> to vector<32x128xf32>
    %164 = arith.mulf %149, %163 : vector<32x128xf32>
    %cst_38 = arith.constant dense<0.000000e+00> : vector<128xf32>
    %165 = vector.multi_reduction <add>, %164, %cst_38 [0] : vector<32x128xf32> to vector<128xf32>
    %166 = vector.shape_cast %165 : vector<128xf32> to vector<1x128xf32>
    %167 = vector.broadcast %38 : f32 to vector<1x128xf32>
    %168 = arith.addf %166, %167 : vector<1x128xf32>
    %169 = math.tanh %168 : vector<1x128xf32>
    %170 = vector.broadcast %22 : vector<32x1xf32> to vector<32x128xf32>
    %171 = vector.broadcast %169 : vector<1x128xf32> to vector<32x128xf32>
    %172 = arith.mulf %170, %171 : vector<32x128xf32>
    %173 = arith.addf %149, %172 : vector<32x128xf32>
    %174 = arith.mulf %169, %169 : vector<1x128xf32>
    %cst_39 = arith.constant 1.000000e+00 : f32
    %175 = vector.broadcast %cst_39 : f32 to vector<1x128xf32>
    %176 = arith.subf %175, %174 : vector<1x128xf32>
    %177 = vector.broadcast %54 : f32 to vector<1x128xf32>
    %178 = arith.mulf %177, %176 : vector<1x128xf32>
    %cst_40 = arith.constant 1.000000e+00 : f32
    %179 = vector.broadcast %cst_40 : f32 to vector<1x128xf32>
    %180 = arith.addf %179, %178 : vector<1x128xf32>
    %181 = math.absf %180 : vector<1x128xf32>
    %cst_41 = arith.constant 1.000000e-15 : f32
    %182 = vector.broadcast %cst_41 : f32 to vector<1x128xf32>
    %183 = arith.addf %181, %182 : vector<1x128xf32>
    %184 = vector.broadcast %7 : vector<32x1xf32> to vector<32x128xf32>
    %185 = arith.mulf %173, %184 : vector<32x128xf32>
    %cst_42 = arith.constant dense<0.000000e+00> : vector<128xf32>
    %186 = vector.multi_reduction <add>, %185, %cst_42 [0] : vector<32x128xf32> to vector<128xf32>
    %187 = vector.shape_cast %186 : vector<128xf32> to vector<1x128xf32>
    %188 = vector.broadcast %39 : f32 to vector<1x128xf32>
    %189 = arith.addf %187, %188 : vector<1x128xf32>
    %190 = math.tanh %189 : vector<1x128xf32>
    %191 = vector.broadcast %23 : vector<32x1xf32> to vector<32x128xf32>
    %192 = vector.broadcast %190 : vector<1x128xf32> to vector<32x128xf32>
    %193 = arith.mulf %191, %192 : vector<32x128xf32>
    %194 = arith.addf %173, %193 : vector<32x128xf32>
    %195 = arith.mulf %190, %190 : vector<1x128xf32>
    %cst_43 = arith.constant 1.000000e+00 : f32
    %196 = vector.broadcast %cst_43 : f32 to vector<1x128xf32>
    %197 = arith.subf %196, %195 : vector<1x128xf32>
    %198 = vector.broadcast %55 : f32 to vector<1x128xf32>
    %199 = arith.mulf %198, %197 : vector<1x128xf32>
    %cst_44 = arith.constant 1.000000e+00 : f32
    %200 = vector.broadcast %cst_44 : f32 to vector<1x128xf32>
    %201 = arith.addf %200, %199 : vector<1x128xf32>
    %202 = math.absf %201 : vector<1x128xf32>
    %cst_45 = arith.constant 1.000000e-15 : f32
    %203 = vector.broadcast %cst_45 : f32 to vector<1x128xf32>
    %204 = arith.addf %202, %203 : vector<1x128xf32>
    %205 = arith.mulf %183, %204 : vector<1x128xf32>
    %206 = math.log %205 : vector<1x128xf32>
    %207 = arith.addf %162, %206 : vector<1x128xf32>
    %208 = vector.broadcast %8 : vector<32x1xf32> to vector<32x128xf32>
    %209 = arith.mulf %194, %208 : vector<32x128xf32>
    %cst_46 = arith.constant dense<0.000000e+00> : vector<128xf32>
    %210 = vector.multi_reduction <add>, %209, %cst_46 [0] : vector<32x128xf32> to vector<128xf32>
    %211 = vector.shape_cast %210 : vector<128xf32> to vector<1x128xf32>
    %212 = vector.broadcast %40 : f32 to vector<1x128xf32>
    %213 = arith.addf %211, %212 : vector<1x128xf32>
    %214 = math.tanh %213 : vector<1x128xf32>
    %215 = vector.broadcast %24 : vector<32x1xf32> to vector<32x128xf32>
    %216 = vector.broadcast %214 : vector<1x128xf32> to vector<32x128xf32>
    %217 = arith.mulf %215, %216 : vector<32x128xf32>
    %218 = arith.addf %194, %217 : vector<32x128xf32>
    %219 = arith.mulf %214, %214 : vector<1x128xf32>
    %cst_47 = arith.constant 1.000000e+00 : f32
    %220 = vector.broadcast %cst_47 : f32 to vector<1x128xf32>
    %221 = arith.subf %220, %219 : vector<1x128xf32>
    %222 = vector.broadcast %56 : f32 to vector<1x128xf32>
    %223 = arith.mulf %222, %221 : vector<1x128xf32>
    %cst_48 = arith.constant 1.000000e+00 : f32
    %224 = vector.broadcast %cst_48 : f32 to vector<1x128xf32>
    %225 = arith.addf %224, %223 : vector<1x128xf32>
    %226 = math.absf %225 : vector<1x128xf32>
    %cst_49 = arith.constant 1.000000e-15 : f32
    %227 = vector.broadcast %cst_49 : f32 to vector<1x128xf32>
    %228 = arith.addf %226, %227 : vector<1x128xf32>
    %229 = vector.broadcast %9 : vector<32x1xf32> to vector<32x128xf32>
    %230 = arith.mulf %218, %229 : vector<32x128xf32>
    %cst_50 = arith.constant dense<0.000000e+00> : vector<128xf32>
    %231 = vector.multi_reduction <add>, %230, %cst_50 [0] : vector<32x128xf32> to vector<128xf32>
    %232 = vector.shape_cast %231 : vector<128xf32> to vector<1x128xf32>
    %233 = vector.broadcast %41 : f32 to vector<1x128xf32>
    %234 = arith.addf %232, %233 : vector<1x128xf32>
    %235 = math.tanh %234 : vector<1x128xf32>
    %236 = vector.broadcast %25 : vector<32x1xf32> to vector<32x128xf32>
    %237 = vector.broadcast %235 : vector<1x128xf32> to vector<32x128xf32>
    %238 = arith.mulf %236, %237 : vector<32x128xf32>
    %239 = arith.addf %218, %238 : vector<32x128xf32>
    %240 = arith.mulf %235, %235 : vector<1x128xf32>
    %cst_51 = arith.constant 1.000000e+00 : f32
    %241 = vector.broadcast %cst_51 : f32 to vector<1x128xf32>
    %242 = arith.subf %241, %240 : vector<1x128xf32>
    %243 = vector.broadcast %57 : f32 to vector<1x128xf32>
    %244 = arith.mulf %243, %242 : vector<1x128xf32>
    %cst_52 = arith.constant 1.000000e+00 : f32
    %245 = vector.broadcast %cst_52 : f32 to vector<1x128xf32>
    %246 = arith.addf %245, %244 : vector<1x128xf32>
    %247 = math.absf %246 : vector<1x128xf32>
    %cst_53 = arith.constant 1.000000e-15 : f32
    %248 = vector.broadcast %cst_53 : f32 to vector<1x128xf32>
    %249 = arith.addf %247, %248 : vector<1x128xf32>
    %250 = arith.mulf %228, %249 : vector<1x128xf32>
    %251 = math.log %250 : vector<1x128xf32>
    %252 = arith.addf %207, %251 : vector<1x128xf32>
    %253 = vector.broadcast %10 : vector<32x1xf32> to vector<32x128xf32>
    %254 = arith.mulf %239, %253 : vector<32x128xf32>
    %cst_54 = arith.constant dense<0.000000e+00> : vector<128xf32>
    %255 = vector.multi_reduction <add>, %254, %cst_54 [0] : vector<32x128xf32> to vector<128xf32>
    %256 = vector.shape_cast %255 : vector<128xf32> to vector<1x128xf32>
    %257 = vector.broadcast %42 : f32 to vector<1x128xf32>
    %258 = arith.addf %256, %257 : vector<1x128xf32>
    %259 = math.tanh %258 : vector<1x128xf32>
    %260 = vector.broadcast %26 : vector<32x1xf32> to vector<32x128xf32>
    %261 = vector.broadcast %259 : vector<1x128xf32> to vector<32x128xf32>
    %262 = arith.mulf %260, %261 : vector<32x128xf32>
    %263 = arith.addf %239, %262 : vector<32x128xf32>
    %264 = arith.mulf %259, %259 : vector<1x128xf32>
    %cst_55 = arith.constant 1.000000e+00 : f32
    %265 = vector.broadcast %cst_55 : f32 to vector<1x128xf32>
    %266 = arith.subf %265, %264 : vector<1x128xf32>
    %267 = vector.broadcast %58 : f32 to vector<1x128xf32>
    %268 = arith.mulf %267, %266 : vector<1x128xf32>
    %cst_56 = arith.constant 1.000000e+00 : f32
    %269 = vector.broadcast %cst_56 : f32 to vector<1x128xf32>
    %270 = arith.addf %269, %268 : vector<1x128xf32>
    %271 = math.absf %270 : vector<1x128xf32>
    %cst_57 = arith.constant 1.000000e-15 : f32
    %272 = vector.broadcast %cst_57 : f32 to vector<1x128xf32>
    %273 = arith.addf %271, %272 : vector<1x128xf32>
    %274 = vector.broadcast %11 : vector<32x1xf32> to vector<32x128xf32>
    %275 = arith.mulf %263, %274 : vector<32x128xf32>
    %cst_58 = arith.constant dense<0.000000e+00> : vector<128xf32>
    %276 = vector.multi_reduction <add>, %275, %cst_58 [0] : vector<32x128xf32> to vector<128xf32>
    %277 = vector.shape_cast %276 : vector<128xf32> to vector<1x128xf32>
    %278 = vector.broadcast %43 : f32 to vector<1x128xf32>
    %279 = arith.addf %277, %278 : vector<1x128xf32>
    %280 = math.tanh %279 : vector<1x128xf32>
    %281 = vector.broadcast %27 : vector<32x1xf32> to vector<32x128xf32>
    %282 = vector.broadcast %280 : vector<1x128xf32> to vector<32x128xf32>
    %283 = arith.mulf %281, %282 : vector<32x128xf32>
    %284 = arith.addf %263, %283 : vector<32x128xf32>
    %285 = arith.mulf %280, %280 : vector<1x128xf32>
    %cst_59 = arith.constant 1.000000e+00 : f32
    %286 = vector.broadcast %cst_59 : f32 to vector<1x128xf32>
    %287 = arith.subf %286, %285 : vector<1x128xf32>
    %288 = vector.broadcast %59 : f32 to vector<1x128xf32>
    %289 = arith.mulf %288, %287 : vector<1x128xf32>
    %cst_60 = arith.constant 1.000000e+00 : f32
    %290 = vector.broadcast %cst_60 : f32 to vector<1x128xf32>
    %291 = arith.addf %290, %289 : vector<1x128xf32>
    %292 = math.absf %291 : vector<1x128xf32>
    %cst_61 = arith.constant 1.000000e-15 : f32
    %293 = vector.broadcast %cst_61 : f32 to vector<1x128xf32>
    %294 = arith.addf %292, %293 : vector<1x128xf32>
    %295 = arith.mulf %273, %294 : vector<1x128xf32>
    %296 = math.log %295 : vector<1x128xf32>
    %297 = arith.addf %252, %296 : vector<1x128xf32>
    %298 = vector.broadcast %12 : vector<32x1xf32> to vector<32x128xf32>
    %299 = arith.mulf %284, %298 : vector<32x128xf32>
    %cst_62 = arith.constant dense<0.000000e+00> : vector<128xf32>
    %300 = vector.multi_reduction <add>, %299, %cst_62 [0] : vector<32x128xf32> to vector<128xf32>
    %301 = vector.shape_cast %300 : vector<128xf32> to vector<1x128xf32>
    %302 = vector.broadcast %44 : f32 to vector<1x128xf32>
    %303 = arith.addf %301, %302 : vector<1x128xf32>
    %304 = math.tanh %303 : vector<1x128xf32>
    %305 = vector.broadcast %28 : vector<32x1xf32> to vector<32x128xf32>
    %306 = vector.broadcast %304 : vector<1x128xf32> to vector<32x128xf32>
    %307 = arith.mulf %305, %306 : vector<32x128xf32>
    %308 = arith.addf %284, %307 : vector<32x128xf32>
    %309 = arith.mulf %304, %304 : vector<1x128xf32>
    %cst_63 = arith.constant 1.000000e+00 : f32
    %310 = vector.broadcast %cst_63 : f32 to vector<1x128xf32>
    %311 = arith.subf %310, %309 : vector<1x128xf32>
    %312 = vector.broadcast %60 : f32 to vector<1x128xf32>
    %313 = arith.mulf %312, %311 : vector<1x128xf32>
    %cst_64 = arith.constant 1.000000e+00 : f32
    %314 = vector.broadcast %cst_64 : f32 to vector<1x128xf32>
    %315 = arith.addf %314, %313 : vector<1x128xf32>
    %316 = math.absf %315 : vector<1x128xf32>
    %cst_65 = arith.constant 1.000000e-15 : f32
    %317 = vector.broadcast %cst_65 : f32 to vector<1x128xf32>
    %318 = arith.addf %316, %317 : vector<1x128xf32>
    %319 = vector.broadcast %13 : vector<32x1xf32> to vector<32x128xf32>
    %320 = arith.mulf %308, %319 : vector<32x128xf32>
    %cst_66 = arith.constant dense<0.000000e+00> : vector<128xf32>
    %321 = vector.multi_reduction <add>, %320, %cst_66 [0] : vector<32x128xf32> to vector<128xf32>
    %322 = vector.shape_cast %321 : vector<128xf32> to vector<1x128xf32>
    %323 = vector.broadcast %45 : f32 to vector<1x128xf32>
    %324 = arith.addf %322, %323 : vector<1x128xf32>
    %325 = math.tanh %324 : vector<1x128xf32>
    %326 = vector.broadcast %29 : vector<32x1xf32> to vector<32x128xf32>
    %327 = vector.broadcast %325 : vector<1x128xf32> to vector<32x128xf32>
    %328 = arith.mulf %326, %327 : vector<32x128xf32>
    %329 = arith.addf %308, %328 : vector<32x128xf32>
    %330 = arith.mulf %325, %325 : vector<1x128xf32>
    %cst_67 = arith.constant 1.000000e+00 : f32
    %331 = vector.broadcast %cst_67 : f32 to vector<1x128xf32>
    %332 = arith.subf %331, %330 : vector<1x128xf32>
    %333 = vector.broadcast %61 : f32 to vector<1x128xf32>
    %334 = arith.mulf %333, %332 : vector<1x128xf32>
    %cst_68 = arith.constant 1.000000e+00 : f32
    %335 = vector.broadcast %cst_68 : f32 to vector<1x128xf32>
    %336 = arith.addf %335, %334 : vector<1x128xf32>
    %337 = math.absf %336 : vector<1x128xf32>
    %cst_69 = arith.constant 1.000000e-15 : f32
    %338 = vector.broadcast %cst_69 : f32 to vector<1x128xf32>
    %339 = arith.addf %337, %338 : vector<1x128xf32>
    %340 = arith.mulf %318, %339 : vector<1x128xf32>
    %341 = math.log %340 : vector<1x128xf32>
    %342 = arith.addf %297, %341 : vector<1x128xf32>
    %343 = vector.broadcast %14 : vector<32x1xf32> to vector<32x128xf32>
    %344 = arith.mulf %329, %343 : vector<32x128xf32>
    %cst_70 = arith.constant dense<0.000000e+00> : vector<128xf32>
    %345 = vector.multi_reduction <add>, %344, %cst_70 [0] : vector<32x128xf32> to vector<128xf32>
    %346 = vector.shape_cast %345 : vector<128xf32> to vector<1x128xf32>
    %347 = vector.broadcast %46 : f32 to vector<1x128xf32>
    %348 = arith.addf %346, %347 : vector<1x128xf32>
    %349 = math.tanh %348 : vector<1x128xf32>
    %350 = vector.broadcast %30 : vector<32x1xf32> to vector<32x128xf32>
    %351 = vector.broadcast %349 : vector<1x128xf32> to vector<32x128xf32>
    %352 = arith.mulf %350, %351 : vector<32x128xf32>
    %353 = arith.addf %329, %352 : vector<32x128xf32>
    %354 = arith.mulf %349, %349 : vector<1x128xf32>
    %cst_71 = arith.constant 1.000000e+00 : f32
    %355 = vector.broadcast %cst_71 : f32 to vector<1x128xf32>
    %356 = arith.subf %355, %354 : vector<1x128xf32>
    %357 = vector.broadcast %62 : f32 to vector<1x128xf32>
    %358 = arith.mulf %357, %356 : vector<1x128xf32>
    %cst_72 = arith.constant 1.000000e+00 : f32
    %359 = vector.broadcast %cst_72 : f32 to vector<1x128xf32>
    %360 = arith.addf %359, %358 : vector<1x128xf32>
    %361 = math.absf %360 : vector<1x128xf32>
    %cst_73 = arith.constant 1.000000e-15 : f32
    %362 = vector.broadcast %cst_73 : f32 to vector<1x128xf32>
    %363 = arith.addf %361, %362 : vector<1x128xf32>
    %364 = vector.broadcast %15 : vector<32x1xf32> to vector<32x128xf32>
    %365 = arith.mulf %353, %364 : vector<32x128xf32>
    %cst_74 = arith.constant dense<0.000000e+00> : vector<128xf32>
    %366 = vector.multi_reduction <add>, %365, %cst_74 [0] : vector<32x128xf32> to vector<128xf32>
    %367 = vector.shape_cast %366 : vector<128xf32> to vector<1x128xf32>
    %368 = vector.broadcast %47 : f32 to vector<1x128xf32>
    %369 = arith.addf %367, %368 : vector<1x128xf32>
    %370 = math.tanh %369 : vector<1x128xf32>
    %371 = vector.broadcast %31 : vector<32x1xf32> to vector<32x128xf32>
    %372 = vector.broadcast %370 : vector<1x128xf32> to vector<32x128xf32>
    %373 = arith.mulf %371, %372 : vector<32x128xf32>
    %374 = arith.addf %353, %373 : vector<32x128xf32>
    %375 = arith.mulf %370, %370 : vector<1x128xf32>
    %cst_75 = arith.constant 1.000000e+00 : f32
    %376 = vector.broadcast %cst_75 : f32 to vector<1x128xf32>
    %377 = arith.subf %376, %375 : vector<1x128xf32>
    %378 = vector.broadcast %63 : f32 to vector<1x128xf32>
    %379 = arith.mulf %378, %377 : vector<1x128xf32>
    %cst_76 = arith.constant 1.000000e+00 : f32
    %380 = vector.broadcast %cst_76 : f32 to vector<1x128xf32>
    %381 = arith.addf %380, %379 : vector<1x128xf32>
    %382 = math.absf %381 : vector<1x128xf32>
    %cst_77 = arith.constant 1.000000e-15 : f32
    %383 = vector.broadcast %cst_77 : f32 to vector<1x128xf32>
    %384 = arith.addf %382, %383 : vector<1x128xf32>
    %385 = arith.mulf %363, %384 : vector<1x128xf32>
    %386 = math.log %385 : vector<1x128xf32>
    %387 = arith.addf %342, %386 : vector<1x128xf32>
    %388 = vector.broadcast %16 : vector<32x1xf32> to vector<32x128xf32>
    %389 = arith.mulf %374, %388 : vector<32x128xf32>
    %cst_78 = arith.constant dense<0.000000e+00> : vector<128xf32>
    %390 = vector.multi_reduction <add>, %389, %cst_78 [0] : vector<32x128xf32> to vector<128xf32>
    %391 = vector.shape_cast %390 : vector<128xf32> to vector<1x128xf32>
    %392 = vector.broadcast %48 : f32 to vector<1x128xf32>
    %393 = arith.addf %391, %392 : vector<1x128xf32>
    %394 = math.tanh %393 : vector<1x128xf32>
    %395 = vector.broadcast %32 : vector<32x1xf32> to vector<32x128xf32>
    %396 = vector.broadcast %394 : vector<1x128xf32> to vector<32x128xf32>
    %397 = arith.mulf %395, %396 : vector<32x128xf32>
    %398 = arith.addf %374, %397 : vector<32x128xf32>
    %399 = arith.mulf %394, %394 : vector<1x128xf32>
    %cst_79 = arith.constant 1.000000e+00 : f32
    %400 = vector.broadcast %cst_79 : f32 to vector<1x128xf32>
    %401 = arith.subf %400, %399 : vector<1x128xf32>
    %402 = vector.broadcast %64 : f32 to vector<1x128xf32>
    %403 = arith.mulf %402, %401 : vector<1x128xf32>
    %cst_80 = arith.constant 1.000000e+00 : f32
    %404 = vector.broadcast %cst_80 : f32 to vector<1x128xf32>
    %405 = arith.addf %404, %403 : vector<1x128xf32>
    %406 = math.absf %405 : vector<1x128xf32>
    %cst_81 = arith.constant 1.000000e-15 : f32
    %407 = vector.broadcast %cst_81 : f32 to vector<1x128xf32>
    %408 = arith.addf %406, %407 : vector<1x128xf32>
    %409 = vector.broadcast %17 : vector<32x1xf32> to vector<32x128xf32>
    %410 = arith.mulf %398, %409 : vector<32x128xf32>
    %cst_82 = arith.constant dense<0.000000e+00> : vector<128xf32>
    %411 = vector.multi_reduction <add>, %410, %cst_82 [0] : vector<32x128xf32> to vector<128xf32>
    %412 = vector.shape_cast %411 : vector<128xf32> to vector<1x128xf32>
    %413 = vector.broadcast %49 : f32 to vector<1x128xf32>
    %414 = arith.addf %412, %413 : vector<1x128xf32>
    %415 = math.tanh %414 : vector<1x128xf32>
    %416 = vector.broadcast %33 : vector<32x1xf32> to vector<32x128xf32>
    %417 = vector.broadcast %415 : vector<1x128xf32> to vector<32x128xf32>
    %418 = arith.mulf %416, %417 : vector<32x128xf32>
    %419 = arith.addf %398, %418 : vector<32x128xf32>
    %420 = arith.mulf %415, %415 : vector<1x128xf32>
    %cst_83 = arith.constant 1.000000e+00 : f32
    %421 = vector.broadcast %cst_83 : f32 to vector<1x128xf32>
    %422 = arith.subf %421, %420 : vector<1x128xf32>
    %423 = vector.broadcast %65 : f32 to vector<1x128xf32>
    %424 = arith.mulf %423, %422 : vector<1x128xf32>
    %cst_84 = arith.constant 1.000000e+00 : f32
    %425 = vector.broadcast %cst_84 : f32 to vector<1x128xf32>
    %426 = arith.addf %425, %424 : vector<1x128xf32>
    %427 = math.absf %426 : vector<1x128xf32>
    %cst_85 = arith.constant 1.000000e-15 : f32
    %428 = vector.broadcast %cst_85 : f32 to vector<1x128xf32>
    %429 = arith.addf %427, %428 : vector<1x128xf32>
    %430 = arith.mulf %408, %429 : vector<1x128xf32>
    %431 = math.log %430 : vector<1x128xf32>
    %432 = arith.addf %387, %431 : vector<1x128xf32>
    %c0_86 = arith.constant 0 : index
    %433 = arith.index_cast %69 : i32 to index
    %434 = vector.load %arg6[%c0_86, %433] : memref<32x128xf32, #tpu.memory_space<vmem>>, vector<32x128xf32>
    tpu.vector_store %arg6[%c0_86, %433], %419 {strides = array<i32>} : memref<32x128xf32, #tpu.memory_space<vmem>>, vector<32x128xf32>,
    %c0_87 = arith.constant 0 : index
    %435 = arith.index_cast %69 : i32 to index
    %436 = vector.load %arg7[%c0_87, %435] : memref<1x128xf32, #tpu.memory_space<vmem>>, vector<1x128xf32>
    tpu.vector_store %arg7[%c0_87, %435], %432 {strides = array<i32>} : memref<1x128xf32, #tpu.memory_space<vmem>>, vector<1x128xf32>,
    %c1_i32_88 = arith.constant 1 : i32
    return
  }
  func.func @transform_0(%arg0: i32) -> i32 {
    %c0_i32 = arith.constant 0 : i32
    %c0_i32_0 = arith.constant 0 : i32
    return %c0_i32 : i32
  }
  func.func @transform_1(%arg0: i32) -> i32 {
    %c0_i32 = arith.constant 0 : i32
    %c0_i32_0 = arith.constant 0 : i32
    return %c0_i32 : i32
  }
  func.func @transform_2(%arg0: i32) -> (i32, i32) {
    %c0_i32 = arith.constant 0 : i32
    %c0_i32_0 = arith.constant 0 : i32
    %c0_i32_1 = arith.constant 0 : i32
    return %c0_i32, %c0_i32_0 : i32, i32
  }
  func.func @transform_3(%arg0: i32) -> (i32, i32) {
    %c0_i32 = arith.constant 0 : i32
    %c0_i32_0 = arith.constant 0 : i32
    %c0_i32_1 = arith.constant 0 : i32
    return %c0_i32, %c0_i32_0 : i32, i32
  }
  func.func @transform_4(%arg0: i32) -> (i32, i32) {
    %c0_i32 = arith.constant 0 : i32
    %c0_i32_0 = arith.constant 0 : i32
    return %c0_i32, %arg0 : i32, i32
  }
  func.func @transform_5(%arg0: i32) -> (i32, i32) {
    %c0_i32 = arith.constant 0 : i32
    %c0_i32_0 = arith.constant 0 : i32
    return %c0_i32, %arg0 : i32, i32
  }
  func.func @transform_6(%arg0: i32) -> (i32, i32) {
    %c0_i32 = arith.constant 0 : i32
    %c0_i32_0 = arith.constant 0 : i32
    return %c0_i32, %arg0 : i32, i32
  }
}

</mosaic_0001>

<llo_original>
// kernel: layered_planar_flow.1
$region0: #{layered_planar_flow.1}
  #allocation0 [shape = 'u32[]', space=smem, size = 0x4, offset = 0x4, fixed_abs, tag = 'smem constant byte address 0x4 - core index']
  #allocation1 [shape = 'u32[144,128]{1,0:T(1,128)}', space=vmem, size = 0x12000, scoped, tag = 'internal scratch']
  %s0 = inlined_call_operand.vmem [shape: f32[16], index: 0, kind: input, shape index: {}]
  %s1 = inlined_call_operand.vmem [shape: f32[16], index: 1, kind: input, shape index: {}]
  %s2 = inlined_call_operand.vmem [shape: f32[32,16], index: 2, kind: input, shape index: {}]
  %s3 = inlined_call_operand.vmem [shape: f32[32,16], index: 3, kind: input, shape index: {}]
  %s4 = inlined_call_operand.vmem [shape: f32[32,128], index: 4, kind: input, shape index: {}]
  %s5 = inlined_call_operand.vmem [shape: f32[32,128], index: 5, kind: output, shape index: {0}]
  %s6 = inlined_call_operand.vmem [shape: f32[1,128], index: 6, kind: output, shape index: {1}]
  %7 = xla_tuple %s5, %s6
  %s8 = sld [smem:[#allocation0]]
  $region46: #{layered_planar_flow.1} parent=0
    _
  %s10 = ssub.s32 1, %s8
  %s11 = scalar_select 0, %s10, %s8
  $region1: #{layered_planar_flow.1} parent=0
    #allocation2 [shape = 'u8[512]{0}', space=smem, size = 0x200, scoped, tag = 'input window, operand 0, single buffered']
    #allocation3 [shape = 's32[1]{0}', space=sflag, size = 0x4, scoped, tag = 'scoped memory for layered_planar_flow.1']
    #allocation4 [shape = 'u8[512]{0}', space=smem, size = 0x200, scoped, tag = 'input window, operand 1, single buffered']
    #allocation5 [shape = 's32[1]{0}', space=sflag, size = 0x4, scoped, tag = 'scoped memory for layered_planar_flow.1']
    %12 = vsyncpa [#allocation3], 0
    %13 = vsyncpa [#allocation5], 0
    // Predicated region
    $region2: #{layered_planar_flow.1} parent=1 // pred_check
      _
    $region3: #{layered_planar_flow.1} parent=1 // pred_check_branch
      %15 = sbr.rel (0) target = $region5
    $region4: #{layered_planar_flow.1} parent=1 // pred_region
      %s17 = ssub.s32 16, 16
      %18 = vsyncadd [#allocation3], %s17
      %s20 = sshll.u32 %s0, 4
      %s21 = int_to_ptr.vmem [resolvable:$true] %s20
      %23 = dma.vmem_to_smem %s21, 16, [#allocation2], [#allocation3]
    $region5: #{layered_planar_flow.1} parent=1 // pred_fallthru
      _
    // Predicated region
    $region6: #{layered_planar_flow.1} parent=1 // pred_check
      _
    $region7: #{layered_planar_flow.1} parent=1 // pred_check_branch
      %25 = sbr.rel (0) target = $region9
    $region8: #{layered_planar_flow.1} parent=1 // pred_region
      %s27 = ssub.s32 16, 16
      %28 = vsyncadd [#allocation5], %s27
      %s30 = sshll.u32 %s1, 4
      %s31 = int_to_ptr.vmem [resolvable:$true] %s30
      %33 = dma.vmem_to_smem %s31, 16, [#allocation4], [#allocation5]
    $region9: #{layered_planar_flow.1} parent=1 // pred_fallthru
      _
    // Predicated region
    $region10: #{layered_planar_flow.1} parent=1 // pred_check
      _
    $region11: #{layered_planar_flow.1} parent=1 // pred_check_branch
      %35 = sbr.rel (0) target = $region13
    $region12: #{layered_planar_flow.1} parent=1 // pred_region
      _
    $region13: #{layered_planar_flow.1} parent=1 // pred_fallthru
      _
    // Predicated region
    $region14: #{layered_planar_flow.1} parent=1 // pred_check
      _
    $region15: #{layered_planar_flow.1} parent=1 // pred_check_branch
      %37 = sbr.rel (0) target = $region17
    $region16: #{layered_planar_flow.1} parent=1 // pred_region
      _
    $region17: #{layered_planar_flow.1} parent=1 // pred_fallthru
      _
    // Predicated region
    $region18: #{layered_planar_flow.1} parent=1 // pred_check
      _
    $region19: #{layered_planar_flow.1} parent=1 // pred_check_branch
      %39 = sbr.rel (0) target = $region21
    $region20: #{layered_planar_flow.1} parent=1 // pred_region
      _
    $region21: #{layered_planar_flow.1} parent=1 // pred_fallthru
      _
    // Predicated region
    $region22: #{layered_planar_flow.1} parent=1 // pred_check
      _
    $region23: #{layered_planar_flow.1} parent=1 // pred_check_branch
      %41 = sbr.rel (0) target = $region25
    $region24: #{layered_planar_flow.1} parent=1 // pred_region
      %42 = dma.done [#allocation3], 16
    $region25: #{layered_planar_flow.1} parent=1 // pred_fallthru
      _
    // Predicated region
    $region26: #{layered_planar_flow.1} parent=1 // pred_check
      _
    $region27: #{layered_planar_flow.1} parent=1 // pred_check_branch
      %44 = sbr.rel (0) target = $region29
    $region28: #{layered_planar_flow.1} parent=1 // pred_region
      %45 = dma.done [#allocation5], 16
    $region29: #{layered_planar_flow.1} parent=1 // pred_fallthru
      _
    %46 = sfence
    %v47 = vld [vmem:[%s2] sm:$0xff]
    %v48 = vld [vmem:[%s2 + $0x8] sm:$0xff]
    %v49 = vld [vmem:[%s2 + $0x10] sm:$0xff]
    %v50 = vld [vmem:[%s2 + $0x18] sm:$0xff]
    %v51 = vld [vmem:[%s3] sm:$0xff]
    %v52 = vld [vmem:[%s3 + $0x8] sm:$0xff]
    %v53 = vld [vmem:[%s3 + $0x10] sm:$0xff]
    %v54 = vld [vmem:[%s3 + $0x18] sm:$0xff]
    %s55 = sld [smem:[#allocation2]]
    %s56 = sld [smem:[#allocation2 + $0x1]]
    %s57 = sld [smem:[#allocation2 + $0x2]]
    %s58 = sld [smem:[#allocation2 + $0x3]]
    %s59 = sld [smem:[#allocation2 + $0x4]]
    %s60 = sld [smem:[#allocation2 + $0x5]]
    %s61 = sld [smem:[#allocation2 + $0x6]]
    %s62 = sld [smem:[#allocation2 + $0x7]]
    %s63 = sld [smem:[#allocation2 + $0x8]]
    %s64 = sld [smem:[#allocation2 + $0x9]]
    %s65 = sld [smem:[#allocation2 + $0xa]]
    %s66 = sld [smem:[#allocation2 + $0xb]]
    %s67 = sld [smem:[#allocation2 + $0xc]]
    %s68 = sld [smem:[#allocation2 + $0xd]]
    %s69 = sld [smem:[#allocation2 + $0xe]]
    %s70 = sld [smem:[#allocation2 + $0xf]]
    %s71 = sld [smem:[#allocation4]]
    %s72 = sld [smem:[#allocation4 + $0x1]]
    %s73 = sld [smem:[#allocation4 + $0x2]]
    %s74 = sld [smem:[#allocation4 + $0x3]]
    %s75 = sld [smem:[#allocation4 + $0x4]]
    %s76 = sld [smem:[#allocation4 + $0x5]]
    %s77 = sld [smem:[#allocation4 + $0x6]]
    %s78 = sld [smem:[#allocation4 + $0x7]]
    %s79 = sld [smem:[#allocation4 + $0x8]]
    %s80 = sld [smem:[#allocation4 + $0x9]]
    %s81 = sld [smem:[#allocation4 + $0xa]]
    %s82 = sld [smem:[#allocation4 + $0xb]]
    %s83 = sld [smem:[#allocation4 + $0xc]]
    %s84 = sld [smem:[#allocation4 + $0xd]]
    %s85 = sld [smem:[#allocation4 + $0xe]]
    %s86 = sld [smem:[#allocation4 + $0xf]]
    %v87 = vld [vmem:[%s4] sm:$0xff]
    %v88 = vld [vmem:[%s4 + $0x8] sm:$0xff]
    %v89 = vld [vmem:[%s4 + $0x10] sm:$0xff]
    %v90 = vld [vmem:[%s4 + $0x18] sm:$0xff]
    %92 = vset.pattern.permute.xlu0 0
    %93 = vperm.xlu0 %92, %v47
    %v94 = vpop.permute.xlu0 %93
    %97 = vset.pattern.permute.xlu0 0
    %98 = vperm.xlu0 %97, %v48
    %v99 = vpop.permute.xlu0 %98
    %102 = vset.pattern.permute.xlu0 0
    %103 = vperm.xlu0 %102, %v49
    %v104 = vpop.permute.xlu0 %103
    %107 = vset.pattern.permute.xlu0 0
    %108 = vperm.xlu0 %107, %v50
    %v109 = vpop.permute.xlu0 %108
    %v111 = vmul.f32 %v87, %v94
    %v112 = vmul.f32 %v88, %v99
    %v113 = vmul.f32 %v89, %v104
    %v114 = vmul.f32 %v90, %v109
    %v115 = vadd.f32 %v111, %v112
    %v116 = vadd.f32 %v115, %v113
    %v117 = vadd.f32 %v116, %v114
    %v118 = vrot.slane %v117, 4
    %v119 = vadd.f32 %v117, %v118
    %v120 = vrot.slane %v119, 2
    %v121 = vadd.f32 %v119, %v120
    %v122 = vrot.slane %v121, 1
    %v123 = vadd.f32 %v121, %v122
    %v124 = vstv %s55
    %v125 = vadd.f32 %v123, %v124
    %v126 = vtanh.pop %v125
    %128 = vset.pattern.permute.xlu0 0
    %129 = vperm.xlu0 %128, %v51
    %v130 = vpop.permute.xlu0 %129
    %133 = vset.pattern.permute.xlu0 0
    %134 = vperm.xlu0 %133, %v52
    %v135 = vpop.permute.xlu0 %134
    %138 = vset.pattern.permute.xlu0 0
    %139 = vperm.xlu0 %138, %v53
    %v140 = vpop.permute.xlu0 %139
    %143 = vset.pattern.permute.xlu0 0
    %144 = vperm.xlu0 %143, %v54
    %v145 = vpop.permute.xlu0 %144
    %v147 = vmul.f32 %v130, %v126
    %v148 = vmul.f32 %v135, %v126
    %v149 = vmul.f32 %v140, %v126
    %v150 = vmul.f32 %v145, %v126
    %v151 = vadd.f32 %v87, %v147
    %v152 = vadd.f32 %v88, %v148
    %v153 = vadd.f32 %v89, %v149
    %v154 = vadd.f32 %v90, %v150
    %v155 = vmul.f32 %v126, %v126
    %v156 = vsub.f32 1.0, %v155
    %v157 = vstv %s71
    %v158 = vmul.f32 %v157, %v156
    %v159 = vadd.f32 %v158, 1.0
    %v160 = vand.u32 2147483647, %v159
    %v161 = vadd.f32 %v160, 1e-15
    %162 = vset.pattern.permute.xlu0 1
    %163 = vperm.xlu0 %162, %v47
    %v164 = vpop.permute.xlu0 %163
    %166 = vset.pattern.permute.xlu0 1
    %167 = vperm.xlu0 %166, %v48
    %v168 = vpop.permute.xlu0 %167
    %170 = vset.pattern.permute.xlu0 1
    %171 = vperm.xlu0 %170, %v49
    %v172 = vpop.permute.xlu0 %171
    %174 = vset.pattern.permute.xlu0 1
    %175 = vperm.xlu0 %174, %v50
    %v176 = vpop.permute.xlu0 %175
    %v178 = vmul.f32 %v151, %v164
    %v179 = vmul.f32 %v152, %v168
    %v180 = vmul.f32 %v153, %v172
    %v181 = vmul.f32 %v154, %v176
    %v182 = vadd.f32 %v178, %v179
    %v183 = vadd.f32 %v182, %v180
    %v184 = vadd.f32 %v183, %v181
    %v185 = vrot.slane %v184, 4
    %v186 = vadd.f32 %v184, %v185
    %v187 = vrot.slane %v186, 2
    %v188 = vadd.f32 %v186, %v187
    %v189 = vrot.slane %v188, 1
    %v190 = vadd.f32 %v188, %v189
    %v191 = vstv %s56
    %v192 = vadd.f32 %v190, %v191
    %v193 = vtanh.pop %v192
    %194 = vset.pattern.permute.xlu0 1
    %195 = vperm.xlu0 %194, %v51
    %v196 = vpop.permute.xlu0 %195
    %198 = vset.pattern.permute.xlu0 1
    %199 = vperm.xlu0 %198, %v52
    %v200 = vpop.permute.xlu0 %199
    %202 = vset.pattern.permute.xlu0 1
    %203 = vperm.xlu0 %202, %v53
    %v204 = vpop.permute.xlu0 %203
    %206 = vset.pattern.permute.xlu0 1
    %207 = vperm.xlu0 %206, %v54
    %v208 = vpop.permute.xlu0 %207
    %v210 = vmul.f32 %v196, %v193
    %v211 = vmul.f32 %v200, %v193
    %v212 = vmul.f32 %v204, %v193
    %v213 = vmul.f32 %v208, %v193
    %v214 = vadd.f32 %v151, %v210
    %v215 = vadd.f32 %v152, %v211
    %v216 = vadd.f32 %v153, %v212
    %v217 = vadd.f32 %v154, %v213
    %v218 = vmul.f32 %v193, %v193
    %v219 = vsub.f32 1.0, %v218
    %v220 = vstv %s72
    %v221 = vmul.f32 %v220, %v219
    %v222 = vadd.f32 %v221, 1.0
    %v223 = vand.u32 2147483647, %v222
    %v224 = vadd.f32 %v223, 1e-15
    %v225 = vmul.f32 %v161, %v224
    %v226 = vlog2.pop %v225
    %v227 = vmul.f32 %v226, 0.6931472
    %v228 = vadd.f32 %v227, 0.0
    %229 = vset.pattern.permute.xlu0 2
    %230 = vperm.xlu0 %229, %v47
    %v231 = vpop.permute.xlu0 %230
    %233 = vset.pattern.permute.xlu0 2
    %234 = vperm.xlu0 %233, %v48
    %v235 = vpop.permute.xlu0 %234
    %237 = vset.pattern.permute.xlu0 2
    %238 = vperm.xlu0 %237, %v49
    %v239 = vpop.permute.xlu0 %238
    %241 = vset.pattern.permute.xlu0 2
    %242 = vperm.xlu0 %241, %v50
    %v243 = vpop.permute.xlu0 %242
    %v245 = vmul.f32 %v214, %v231
    %v246 = vmul.f32 %v215, %v235
    %v247 = vmul.f32 %v216, %v239
    %v248 = vmul.f32 %v217, %v243
    %v249 = vadd.f32 %v245, %v246
    %v250 = vadd.f32 %v249, %v247
    %v251 = vadd.f32 %v250, %v248
    %v252 = vrot.slane %v251, 4
    %v253 = vadd.f32 %v251, %v252
    %v254 = vrot.slane %v253, 2
    %v255 = vadd.f32 %v253, %v254
    %v256 = vrot.slane %v255, 1
    %v257 = vadd.f32 %v255, %v256
    %v258 = vstv %s57
    %v259 = vadd.f32 %v257, %v258
    %v260 = vtanh.pop %v259
    %261 = vset.pattern.permute.xlu0 2
    %262 = vperm.xlu0 %261, %v51
    %v263 = vpop.permute.xlu0 %262
    %265 = vset.pattern.permute.xlu0 2
    %266 = vperm.xlu0 %265, %v52
    %v267 = vpop.permute.xlu0 %266
    %269 = vset.pattern.permute.xlu0 2
    %270 = vperm.xlu0 %269, %v53
    %v271 = vpop.permute.xlu0 %270
    %273 = vset.pattern.permute.xlu0 2
    %274 = vperm.xlu0 %273, %v54
    %v275 = vpop.permute.xlu0 %274
    %v277 = vmul.f32 %v263, %v260
    %v278 = vmul.f32 %v267, %v260
    %v279 = vmul.f32 %v271, %v260
    %v280 = vmul.f32 %v275, %v260
    %v281 = vadd.f32 %v214, %v277
    %v282 = vadd.f32 %v215, %v278
    %v283 = vadd.f32 %v216, %v279
    %v284 = vadd.f32 %v217, %v280
    %v285 = vmul.f32 %v260, %v260
    %v286 = vsub.f32 1.0, %v285
    %v287 = vstv %s73
    %v288 = vmul.f32 %v287, %v286
    %v289 = vadd.f32 %v288, 1.0
    %v290 = vand.u32 2147483647, %v289
    %v291 = vadd.f32 %v290, 1e-15
    %292 = vset.pattern.permute.xlu0 3
    %293 = vperm.xlu0 %292, %v47
    %v294 = vpop.permute.xlu0 %293
    %296 = vset.pattern.permute.xlu0 3
    %297 = vperm.xlu0 %296, %v48
    %v298 = vpop.permute.xlu0 %297
    %300 = vset.pattern.permute.xlu0 3
    %301 = vperm.xlu0 %300, %v49
    %v302 = vpop.permute.xlu0 %301
    %304 = vset.pattern.permute.xlu0 3
    %305 = vperm.xlu0 %304, %v50
    %v306 = vpop.permute.xlu0 %305
    %v308 = vmul.f32 %v281, %v294
    %v309 = vmul.f32 %v282, %v298
    %v310 = vmul.f32 %v283, %v302
    %v311 = vmul.f32 %v284, %v306
    %v312 = vadd.f32 %v308, %v309
    %v313 = vadd.f32 %v312, %v310
    %v314 = vadd.f32 %v313, %v311
    %v315 = vrot.slane %v314, 4
    %v316 = vadd.f32 %v314, %v315
    %v317 = vrot.slane %v316, 2
    %v318 = vadd.f32 %v316, %v317
    %v319 = vrot.slane %v318, 1
    %v320 = vadd.f32 %v318, %v319
    %v321 = vstv %s58
    %v322 = vadd.f32 %v320, %v321
    %v323 = vtanh.pop %v322
    %324 = vset.pattern.permute.xlu0 3
    %325 = vperm.xlu0 %324, %v51
    %v326 = vpop.permute.xlu0 %325
    %328 = vset.pattern.permute.xlu0 3
    %329 = vperm.xlu0 %328, %v52
    %v330 = vpop.permute.xlu0 %329
    %332 = vset.pattern.permute.xlu0 3
    %333 = vperm.xlu0 %332, %v53
    %v334 = vpop.permute.xlu0 %333
    %336 = vset.pattern.permute.xlu0 3
    %337 = vperm.xlu0 %336, %v54
    %v338 = vpop.permute.xlu0 %337
    %v340 = vmul.f32 %v326, %v323
    %v341 = vmul.f32 %v330, %v323
    %v342 = vmul.f32 %v334, %v323
    %v343 = vmul.f32 %v338, %v323
    %v344 = vadd.f32 %v281, %v340
    %v345 = vadd.f32 %v282, %v341
    %v346 = vadd.f32 %v283, %v342
    %v347 = vadd.f32 %v284, %v343
    %v348 = vmul.f32 %v323, %v323
    %v349 = vsub.f32 1.0, %v348
    %v350 = vstv %s74
    %v351 = vmul.f32 %v350, %v349
    %v352 = vadd.f32 %v351, 1.0
    %v353 = vand.u32 2147483647, %v352
    %v354 = vadd.f32 %v353, 1e-15
    %v355 = vmul.f32 %v291, %v354
    %v356 = vlog2.pop %v355
    %v357 = vmul.f32 %v356, 0.6931472
    %v358 = vadd.f32 %v228, %v357
    %359 = vset.pattern.permute.xlu0 4
    %360 = vperm.xlu0 %359, %v47
    %v361 = vpop.permute.xlu0 %360
    %363 = vset.pattern.permute.xlu0 4
    %364 = vperm.xlu0 %363, %v48
    %v365 = vpop.permute.xlu0 %364
    %367 = vset.pattern.permute.xlu0 4
    %368 = vperm.xlu0 %367, %v49
    %v369 = vpop.permute.xlu0 %368
    %371 = vset.pattern.permute.xlu0 4
    %372 = vperm.xlu0 %371, %v50
    %v373 = vpop.permute.xlu0 %372
    %v375 = vmul.f32 %v344, %v361
    %v376 = vmul.f32 %v345, %v365
    %v377 = vmul.f32 %v346, %v369
    %v378 = vmul.f32 %v347, %v373
    %v379 = vadd.f32 %v375, %v376
    %v380 = vadd.f32 %v379, %v377
    %v381 = vadd.f32 %v380, %v378
    %v382 = vrot.slane %v381, 4
    %v383 = vadd.f32 %v381, %v382
    %v384 = vrot.slane %v383, 2
    %v385 = vadd.f32 %v383, %v384
    %v386 = vrot.slane %v385, 1
    %v387 = vadd.f32 %v385, %v386
    %v388 = vstv %s59
    %v389 = vadd.f32 %v387, %v388
    %v390 = vtanh.pop %v389
    %391 = vset.pattern.permute.xlu0 4
    %392 = vperm.xlu0 %391, %v51
    %v393 = vpop.permute.xlu0 %392
    %395 = vset.pattern.permute.xlu0 4
    %396 = vperm.xlu0 %395, %v52
    %v397 = vpop.permute.xlu0 %396
    %399 = vset.pattern.permute.xlu0 4
    %400 = vperm.xlu0 %399, %v53
    %v401 = vpop.permute.xlu0 %400
    %403 = vset.pattern.permute.xlu0 4
    %404 = vperm.xlu0 %403, %v54
    %v405 = vpop.permute.xlu0 %404
    %v407 = vmul.f32 %v393, %v390
    %v408 = vmul.f32 %v397, %v390
    %v409 = vmul.f32 %v401, %v390
    %v410 = vmul.f32 %v405, %v390
    %v411 = vadd.f32 %v344, %v407
    %v412 = vadd.f32 %v345, %v408
    %v413 = vadd.f32 %v346, %v409
    %v414 = vadd.f32 %v347, %v410
    %v415 = vmul.f32 %v390, %v390
    %v416 = vsub.f32 1.0, %v415
    %v417 = vstv %s75
    %v418 = vmul.f32 %v417, %v416
    %v419 = vadd.f32 %v418, 1.0
    %v420 = vand.u32 2147483647, %v419
    %v421 = vadd.f32 %v420, 1e-15
    %422 = vset.pattern.permute.xlu0 5
    %423 = vperm.xlu0 %422, %v47
    %v424 = vpop.permute.xlu0 %423
    %426 = vset.pattern.permute.xlu0 5
    %427 = vperm.xlu0 %426, %v48
    %v428 = vpop.permute.xlu0 %427
    %430 = vset.pattern.permute.xlu0 5
    %431 = vperm.xlu0 %430, %v49
    %v432 = vpop.permute.xlu0 %431
    %434 = vset.pattern.permute.xlu0 5
    %435 = vperm.xlu0 %434, %v50
    %v436 = vpop.permute.xlu0 %435
    %v438 = vmul.f32 %v411, %v424
    %v439 = vmul.f32 %v412, %v428
    %v440 = vmul.f32 %v413, %v432
    %v441 = vmul.f32 %v414, %v436
    %v442 = vadd.f32 %v438, %v439
    %v443 = vadd.f32 %v442, %v440
    %v444 = vadd.f32 %v443, %v441
    %v445 = vrot.slane %v444, 4
    %v446 = vadd.f32 %v444, %v445
    %v447 = vrot.slane %v446, 2
    %v448 = vadd.f32 %v446, %v447
    %v449 = vrot.slane %v448, 1
    %v450 = vadd.f32 %v448, %v449
    %v451 = vstv %s60
    %v452 = vadd.f32 %v450, %v451
    %v453 = vtanh.pop %v452
    %454 = vset.pattern.permute.xlu0 5
    %455 = vperm.xlu0 %454, %v51
    %v456 = vpop.permute.xlu0 %455
    %458 = vset.pattern.permute.xlu0 5
    %459 = vperm.xlu0 %458, %v52
    %v460 = vpop.permute.xlu0 %459
    %462 = vset.pattern.permute.xlu0 5
    %463 = vperm.xlu0 %462, %v53
    %v464 = vpop.permute.xlu0 %463
    %466 = vset.pattern.permute.xlu0 5
    %467 = vperm.xlu0 %466, %v54
    %v468 = vpop.permute.xlu0 %467
    %v470 = vmul.f32 %v456, %v453
    %v471 = vmul.f32 %v460, %v453
    %v472 = vmul.f32 %v464, %v453
    %v473 = vmul.f32 %v468, %v453
    %v474 = vadd.f32 %v411, %v470
    %v475 = vadd.f32 %v412, %v471
    %v476 = vadd.f32 %v413, %v472
    %v477 = vadd.f32 %v414, %v473
    %v478 = vmul.f32 %v453, %v453
    %v479 = vsub.f32 1.0, %v478
    %v480 = vstv %s76
    %v481 = vmul.f32 %v480, %v479
    %v482 = vadd.f32 %v481, 1.0
    %v483 = vand.u32 2147483647, %v482
    %v484 = vadd.f32 %v483, 1e-15
    %v485 = vmul.f32 %v421, %v484
    %v486 = vlog2.pop %v485
    %v487 = vmul.f32 %v486, 0.6931472
    %v488 = vadd.f32 %v358, %v487
    %489 = vset.pattern.permute.xlu0 6
    %490 = vperm.xlu0 %489, %v47
    %v491 = vpop.permute.xlu0 %490
    %493 = vset.pattern.permute.xlu0 6
    %494 = vperm.xlu0 %493, %v48
    %v495 = vpop.permute.xlu0 %494
    %497 = vset.pattern.permute.xlu0 6
    %498 = vperm.xlu0 %497, %v49
    %v499 = vpop.permute.xlu0 %498
    %501 = vset.pattern.permute.xlu0 6
    %502 = vperm.xlu0 %501, %v50
    %v503 = vpop.permute.xlu0 %502
    %v505 = vmul.f32 %v474, %v491
    %v506 = vmul.f32 %v475, %v495
    %v507 = vmul.f32 %v476, %v499
    %v508 = vmul.f32 %v477, %v503
    %v509 = vadd.f32 %v505, %v506
    %v510 = vadd.f32 %v509, %v507
    %v511 = vadd.f32 %v510, %v508
    %v512 = vrot.slane %v511, 4
    %v513 = vadd.f32 %v511, %v512
    %v514 = vrot.slane %v513, 2
    %v515 = vadd.f32 %v513, %v514
    %v516 = vrot.slane %v515, 1
    %v517 = vadd.f32 %v515, %v516
    %v518 = vstv %s61
    %v519 = vadd.f32 %v517, %v518
    %v520 = vtanh.pop %v519
    %521 = vset.pattern.permute.xlu0 6
    %522 = vperm.xlu0 %521, %v51
    %v523 = vpop.permute.xlu0 %522
    %525 = vset.pattern.permute.xlu0 6
    %526 = vperm.xlu0 %525, %v52
    %v527 = vpop.permute.xlu0 %526
    %529 = vset.pattern.permute.xlu0 6
    %530 = vperm.xlu0 %529, %v53
    %v531 = vpop.permute.xlu0 %530
    %533 = vset.pattern.permute.xlu0 6
    %534 = vperm.xlu0 %533, %v54
    %v535 = vpop.permute.xlu0 %534
    %v537 = vmul.f32 %v523, %v520
    %v538 = vmul.f32 %v527, %v520
    %v539 = vmul.f32 %v531, %v520
    %v540 = vmul.f32 %v535, %v520
    %v541 = vadd.f32 %v474, %v537
    %v542 = vadd.f32 %v475, %v538
    %v543 = vadd.f32 %v476, %v539
    %v544 = vadd.f32 %v477, %v540
    %v545 = vmul.f32 %v520, %v520
    %v546 = vsub.f32 1.0, %v545
    %v547 = vstv %s77
    %v548 = vmul.f32 %v547, %v546
    %v549 = vadd.f32 %v548, 1.0
    %v550 = vand.u32 2147483647, %v549
    %v551 = vadd.f32 %v550, 1e-15
    %552 = vset.pattern.permute.xlu0 7
    %553 = vperm.xlu0 %552, %v47
    %v554 = vpop.permute.xlu0 %553
    %556 = vset.pattern.permute.xlu0 7
    %557 = vperm.xlu0 %556, %v48
    %v558 = vpop.permute.xlu0 %557
    %560 = vset.pattern.permute.xlu0 7
    %561 = vperm.xlu0 %560, %v49
    %v562 = vpop.permute.xlu0 %561
    %564 = vset.pattern.permute.xlu0 7
    %565 = vperm.xlu0 %564, %v50
    %v566 = vpop.permute.xlu0 %565
    %v568 = vmul.f32 %v541, %v554
    %v569 = vmul.f32 %v542, %v558
    %v570 = vmul.f32 %v543, %v562
    %v571 = vmul.f32 %v544, %v566
    %v572 = vadd.f32 %v568, %v569
    %v573 = vadd.f32 %v572, %v570
    %v574 = vadd.f32 %v573, %v571
    %v575 = vrot.slane %v574, 4
    %v576 = vadd.f32 %v574, %v575
    %v577 = vrot.slane %v576, 2
    %v578 = vadd.f32 %v576, %v577
    %v579 = vrot.slane %v578, 1
    %v580 = vadd.f32 %v578, %v579
    %v581 = vstv %s62
    %v582 = vadd.f32 %v580, %v581
    %v583 = vtanh.pop %v582
    %584 = vset.pattern.permute.xlu0 7
    %585 = vperm.xlu0 %584, %v51
    %v586 = vpop.permute.xlu0 %585
    %588 = vset.pattern.permute.xlu0 7
    %589 = vperm.xlu0 %588, %v52
    %v590 = vpop.permute.xlu0 %589
    %592 = vset.pattern.permute.xlu0 7
    %593 = vperm.xlu0 %592, %v53
    %v594 = vpop.permute.xlu0 %593
    %596 = vset.pattern.permute.xlu0 7
    %597 = vperm.xlu0 %596, %v54
    %v598 = vpop.permute.xlu0 %597
    %v600 = vmul.f32 %v586, %v583
    %v601 = vmul.f32 %v590, %v583
    %v602 = vmul.f32 %v594, %v583
    %v603 = vmul.f32 %v598, %v583
    %v604 = vadd.f32 %v541, %v600
    %v605 = vadd.f32 %v542, %v601
    %v606 = vadd.f32 %v543, %v602
    %v607 = vadd.f32 %v544, %v603
    %v608 = vmul.f32 %v583, %v583
    %v609 = vsub.f32 1.0, %v608
    %v610 = vstv %s78
    %v611 = vmul.f32 %v610, %v609
    %v612 = vadd.f32 %v611, 1.0
    %v613 = vand.u32 2147483647, %v612
    %v614 = vadd.f32 %v613, 1e-15
    %v615 = vmul.f32 %v551, %v614
    %v616 = vlog2.pop %v615
    %v617 = vmul.f32 %v616, 0.6931472
    %v618 = vadd.f32 %v488, %v617
    %619 = vset.pattern.permute.xlu0 8
    %620 = vperm.xlu0 %619, %v47
    %v621 = vpop.permute.xlu0 %620
    %623 = vset.pattern.permute.xlu0 8
    %624 = vperm.xlu0 %623, %v48
    %v625 = vpop.permute.xlu0 %624
    %627 = vset.pattern.permute.xlu0 8
    %628 = vperm.xlu0 %627, %v49
    %v629 = vpop.permute.xlu0 %628
    %631 = vset.pattern.permute.xlu0 8
    %632 = vperm.xlu0 %631, %v50
    %v633 = vpop.permute.xlu0 %632
    %v635 = vmul.f32 %v604, %v621
    %v636 = vmul.f32 %v605, %v625
    %v637 = vmul.f32 %v606, %v629
    %v638 = vmul.f32 %v607, %v633
    %v639 = vadd.f32 %v635, %v636
    %v640 = vadd.f32 %v639, %v637
    %v641 = vadd.f32 %v640, %v638
    %v642 = vrot.slane %v641, 4
    %v643 = vadd.f32 %v641, %v642
    %v644 = vrot.slane %v643, 2
    %v645 = vadd.f32 %v643, %v644
    %v646 = vrot.slane %v645, 1
    %v647 = vadd.f32 %v645, %v646
    %v648 = vstv %s63
    %v649 = vadd.f32 %v647, %v648
    %v650 = vtanh.pop %v649
    %651 = vset.pattern.permute.xlu0 8
    %652 = vperm.xlu0 %651, %v51
    %v653 = vpop.permute.xlu0 %652
    %655 = vset.pattern.permute.xlu0 8
    %656 = vperm.xlu0 %655, %v52
    %v657 = vpop.permute.xlu0 %656
    %659 = vset.pattern.permute.xlu0 8
    %660 = vperm.xlu0 %659, %v53
    %v661 = vpop.permute.xlu0 %660
    %663 = vset.pattern.permute.xlu0 8
    %664 = vperm.xlu0 %663, %v54
    %v665 = vpop.permute.xlu0 %664
    %v667 = vmul.f32 %v653, %v650
    %v668 = vmul.f32 %v657, %v650
    %v669 = vmul.f32 %v661, %v650
    %v670 = vmul.f32 %v665, %v650
    %v671 = vadd.f32 %v604, %v667
    %v672 = vadd.f32 %v605, %v668
    %v673 = vadd.f32 %v606, %v669
    %v674 = vadd.f32 %v607, %v670
    %v675 = vmul.f32 %v650, %v650
    %v676 = vsub.f32 1.0, %v675
    %v677 = vstv %s79
    %v678 = vmul.f32 %v677, %v676
    %v679 = vadd.f32 %v678, 1.0
    %v680 = vand.u32 2147483647, %v679
    %v681 = vadd.f32 %v680, 1e-15
    %682 = vset.pattern.permute.xlu0 9
    %683 = vperm.xlu0 %682, %v47
    %v684 = vpop.permute.xlu0 %683
    %686 = vset.pattern.permute.xlu0 9
    %687 = vperm.xlu0 %686, %v48
    %v688 = vpop.permute.xlu0 %687
    %690 = vset.pattern.permute.xlu0 9
    %691 = vperm.xlu0 %690, %v49
    %v692 = vpop.permute.xlu0 %691
    %694 = vset.pattern.permute.xlu0 9
    %695 = vperm.xlu0 %694, %v50
    %v696 = vpop.permute.xlu0 %695
    %v698 = vmul.f32 %v671, %v684
    %v699 = vmul.f32 %v672, %v688
    %v700 = vmul.f32 %v673, %v692
    %v701 = vmul.f32 %v674, %v696
    %v702 = vadd.f32 %v698, %v699
    %v703 = vadd.f32 %v702, %v700
    %v704 = vadd.f32 %v703, %v701
    %v705 = vrot.slane %v704, 4
    %v706 = vadd.f32 %v704, %v705
    %v707 = vrot.slane %v706, 2
    %v708 = vadd.f32 %v706, %v707
    %v709 = vrot.slane %v708, 1
    %v710 = vadd.f32 %v708, %v709
    %v711 = vstv %s64
    %v712 = vadd.f32 %v710, %v711
    %v713 = vtanh.pop %v712
    %714 = vset.pattern.permute.xlu0 9
    %715 = vperm.xlu0 %714, %v51
    %v716 = vpop.permute.xlu0 %715
    %718 = vset.pattern.permute.xlu0 9
    %719 = vperm.xlu0 %718, %v52
    %v720 = vpop.permute.xlu0 %719
    %722 = vset.pattern.permute.xlu0 9
    %723 = vperm.xlu0 %722, %v53
    %v724 = vpop.permute.xlu0 %723
    %726 = vset.pattern.permute.xlu0 9
    %727 = vperm.xlu0 %726, %v54
    %v728 = vpop.permute.xlu0 %727
    %v730 = vmul.f32 %v716, %v713
    %v731 = vmul.f32 %v720, %v713
    %v732 = vmul.f32 %v724, %v713
    %v733 = vmul.f32 %v728, %v713
    %v734 = vadd.f32 %v671, %v730
    %v735 = vadd.f32 %v672, %v731
    %v736 = vadd.f32 %v673, %v732
    %v737 = vadd.f32 %v674, %v733
    %v738 = vmul.f32 %v713, %v713
    %v739 = vsub.f32 1.0, %v738
    %v740 = vstv %s80
    %v741 = vmul.f32 %v740, %v739
    %v742 = vadd.f32 %v741, 1.0
    %v743 = vand.u32 2147483647, %v742
    %v744 = vadd.f32 %v743, 1e-15
    %v745 = vmul.f32 %v681, %v744
    %v746 = vlog2.pop %v745
    %v747 = vmul.f32 %v746, 0.6931472
    %v748 = vadd.f32 %v618, %v747
    %749 = vset.pattern.permute.xlu0 10
    %750 = vperm.xlu0 %749, %v47
    %v751 = vpop.permute.xlu0 %750
    %753 = vset.pattern.permute.xlu0 10
    %754 = vperm.xlu0 %753, %v48
    %v755 = vpop.permute.xlu0 %754
    %757 = vset.pattern.permute.xlu0 10
    %758 = vperm.xlu0 %757, %v49
    %v759 = vpop.permute.xlu0 %758
    %761 = vset.pattern.permute.xlu0 10
    %762 = vperm.xlu0 %761, %v50
    %v763 = vpop.permute.xlu0 %762
    %v765 = vmul.f32 %v734, %v751
    %v766 = vmul.f32 %v735, %v755
    %v767 = vmul.f32 %v736, %v759
    %v768 = vmul.f32 %v737, %v763
    %v769 = vadd.f32 %v765, %v766
    %v770 = vadd.f32 %v769, %v767
    %v771 = vadd.f32 %v770, %v768
    %v772 = vrot.slane %v771, 4
    %v773 = vadd.f32 %v771, %v772
    %v774 = vrot.slane %v773, 2
    %v775 = vadd.f32 %v773, %v774
    %v776 = vrot.slane %v775, 1
    %v777 = vadd.f32 %v775, %v776
    %v778 = vstv %s65
    %v779 = vadd.f32 %v777, %v778
    %v780 = vtanh.pop %v779
    %781 = vset.pattern.permute.xlu0 10
    %782 = vperm.xlu0 %781, %v51
    %v783 = vpop.permute.xlu0 %782
    %785 = vset.pattern.permute.xlu0 10
    %786 = vperm.xlu0 %785, %v52
    %v787 = vpop.permute.xlu0 %786
    %789 = vset.pattern.permute.xlu0 10
    %790 = vperm.xlu0 %789, %v53
    %v791 = vpop.permute.xlu0 %790
    %793 = vset.pattern.permute.xlu0 10
    %794 = vperm.xlu0 %793, %v54
    %v795 = vpop.permute.xlu0 %794
    %v797 = vmul.f32 %v783, %v780
    %v798 = vmul.f32 %v787, %v780
    %v799 = vmul.f32 %v791, %v780
    %v800 = vmul.f32 %v795, %v780
    %v801 = vadd.f32 %v734, %v797
    %v802 = vadd.f32 %v735, %v798
    %v803 = vadd.f32 %v736, %v799
    %v804 = vadd.f32 %v737, %v800
    %v805 = vmul.f32 %v780, %v780
    %v806 = vsub.f32 1.0, %v805
    %v807 = vstv %s81
    %v808 = vmul.f32 %v807, %v806
    %v809 = vadd.f32 %v808, 1.0
    %v810 = vand.u32 2147483647, %v809
    %v811 = vadd.f32 %v810, 1e-15
    %812 = vset.pattern.permute.xlu0 11
    %813 = vperm.xlu0 %812, %v47
    %v814 = vpop.permute.xlu0 %813
    %816 = vset.pattern.permute.xlu0 11
    %817 = vperm.xlu0 %816, %v48
    %v818 = vpop.permute.xlu0 %817
    %820 = vset.pattern.permute.xlu0 11
    %821 = vperm.xlu0 %820, %v49
    %v822 = vpop.permute.xlu0 %821
    %824 = vset.pattern.permute.xlu0 11
    %825 = vperm.xlu0 %824, %v50
    %v826 = vpop.permute.xlu0 %825
    %v828 = vmul.f32 %v801, %v814
    %v829 = vmul.f32 %v802, %v818
    %v830 = vmul.f32 %v803, %v822
    %v831 = vmul.f32 %v804, %v826
    %v832 = vadd.f32 %v828, %v829
    %v833 = vadd.f32 %v832, %v830
    %v834 = vadd.f32 %v833, %v831
    %v835 = vrot.slane %v834, 4
    %v836 = vadd.f32 %v834, %v835
    %v837 = vrot.slane %v836, 2
    %v838 = vadd.f32 %v836, %v837
    %v839 = vrot.slane %v838, 1
    %v840 = vadd.f32 %v838, %v839
    %v841 = vstv %s66
    %v842 = vadd.f32 %v840, %v841
    %v843 = vtanh.pop %v842
    %844 = vset.pattern.permute.xlu0 11
    %845 = vperm.xlu0 %844, %v51
    %v846 = vpop.permute.xlu0 %845
    %848 = vset.pattern.permute.xlu0 11
    %849 = vperm.xlu0 %848, %v52
    %v850 = vpop.permute.xlu0 %849
    %852 = vset.pattern.permute.xlu0 11
    %853 = vperm.xlu0 %852, %v53
    %v854 = vpop.permute.xlu0 %853
    %856 = vset.pattern.permute.xlu0 11
    %857 = vperm.xlu0 %856, %v54
    %v858 = vpop.permute.xlu0 %857
    %v860 = vmul.f32 %v846, %v843
    %v861 = vmul.f32 %v850, %v843
    %v862 = vmul.f32 %v854, %v843
    %v863 = vmul.f32 %v858, %v843
    %v864 = vadd.f32 %v801, %v860
    %v865 = vadd.f32 %v802, %v861
    %v866 = vadd.f32 %v803, %v862
    %v867 = vadd.f32 %v804, %v863
    %v868 = vmul.f32 %v843, %v843
    %v869 = vsub.f32 1.0, %v868
    %v870 = vstv %s82
    %v871 = vmul.f32 %v870, %v869
    %v872 = vadd.f32 %v871, 1.0
    %v873 = vand.u32 2147483647, %v872
    %v874 = vadd.f32 %v873, 1e-15
    %v875 = vmul.f32 %v811, %v874
    %v876 = vlog2.pop %v875
    %v877 = vmul.f32 %v876, 0.6931472
    %v878 = vadd.f32 %v748, %v877
    %879 = vset.pattern.permute.xlu0 12
    %880 = vperm.xlu0 %879, %v47
    %v881 = vpop.permute.xlu0 %880
    %883 = vset.pattern.permute.xlu0 12
    %884 = vperm.xlu0 %883, %v48
    %v885 = vpop.permute.xlu0 %884
    %887 = vset.pattern.permute.xlu0 12
    %888 = vperm.xlu0 %887, %v49
    %v889 = vpop.permute.xlu0 %888
    %891 = vset.pattern.permute.xlu0 12
    %892 = vperm.xlu0 %891, %v50
    %v893 = vpop.permute.xlu0 %892
    %v895 = vmul.f32 %v864, %v881
    %v896 = vmul.f32 %v865, %v885
    %v897 = vmul.f32 %v866, %v889
    %v898 = vmul.f32 %v867, %v893
    %v899 = vadd.f32 %v895, %v896
    %v900 = vadd.f32 %v899, %v897
    %v901 = vadd.f32 %v900, %v898
    %v902 = vrot.slane %v901, 4
    %v903 = vadd.f32 %v901, %v902
    %v904 = vrot.slane %v903, 2
    %v905 = vadd.f32 %v903, %v904
    %v906 = vrot.slane %v905, 1
    %v907 = vadd.f32 %v905, %v906
    %v908 = vstv %s67
    %v909 = vadd.f32 %v907, %v908
    %v910 = vtanh.pop %v909
    %911 = vset.pattern.permute.xlu0 12
    %912 = vperm.xlu0 %911, %v51
    %v913 = vpop.permute.xlu0 %912
    %915 = vset.pattern.permute.xlu0 12
    %916 = vperm.xlu0 %915, %v52
    %v917 = vpop.permute.xlu0 %916
    %919 = vset.pattern.permute.xlu0 12
    %920 = vperm.xlu0 %919, %v53
    %v921 = vpop.permute.xlu0 %920
    %923 = vset.pattern.permute.xlu0 12
    %924 = vperm.xlu0 %923, %v54
    %v925 = vpop.permute.xlu0 %924
    %v927 = vmul.f32 %v913, %v910
    %v928 = vmul.f32 %v917, %v910
    %v929 = vmul.f32 %v921, %v910
    %v930 = vmul.f32 %v925, %v910
    %v931 = vadd.f32 %v864, %v927
    %v932 = vadd.f32 %v865, %v928
    %v933 = vadd.f32 %v866, %v929
    %v934 = vadd.f32 %v867, %v930
    %v935 = vmul.f32 %v910, %v910
    %v936 = vsub.f32 1.0, %v935
    %v937 = vstv %s83
    %v938 = vmul.f32 %v937, %v936
    %v939 = vadd.f32 %v938, 1.0
    %v940 = vand.u32 2147483647, %v939
    %v941 = vadd.f32 %v940, 1e-15
    %942 = vset.pattern.permute.xlu0 13
    %943 = vperm.xlu0 %942, %v47
    %v944 = vpop.permute.xlu0 %943
    %946 = vset.pattern.permute.xlu0 13
    %947 = vperm.xlu0 %946, %v48
    %v948 = vpop.permute.xlu0 %947
    %950 = vset.pattern.permute.xlu0 13
    %951 = vperm.xlu0 %950, %v49
    %v952 = vpop.permute.xlu0 %951
    %954 = vset.pattern.permute.xlu0 13
    %955 = vperm.xlu0 %954, %v50
    %v956 = vpop.permute.xlu0 %955
    %v958 = vmul.f32 %v931, %v944
    %v959 = vmul.f32 %v932, %v948
    %v960 = vmul.f32 %v933, %v952
    %v961 = vmul.f32 %v934, %v956
    %v962 = vadd.f32 %v958, %v959
    %v963 = vadd.f32 %v962, %v960
    %v964 = vadd.f32 %v963, %v961
    %v965 = vrot.slane %v964, 4
    %v966 = vadd.f32 %v964, %v965
    %v967 = vrot.slane %v966, 2
    %v968 = vadd.f32 %v966, %v967
    %v969 = vrot.slane %v968, 1
    %v970 = vadd.f32 %v968, %v969
    %v971 = vstv %s68
    %v972 = vadd.f32 %v970, %v971
    %v973 = vtanh.pop %v972
    %974 = vset.pattern.permute.xlu0 13
    %975 = vperm.xlu0 %974, %v51
    %v976 = vpop.permute.xlu0 %975
    %978 = vset.pattern.permute.xlu0 13
    %979 = vperm.xlu0 %978, %v52
    %v980 = vpop.permute.xlu0 %979
    %982 = vset.pattern.permute.xlu0 13
    %983 = vperm.xlu0 %982, %v53
    %v984 = vpop.permute.xlu0 %983
    %986 = vset.pattern.permute.xlu0 13
    %987 = vperm.xlu0 %986, %v54
    %v988 = vpop.permute.xlu0 %987
    %v990 = vmul.f32 %v976, %v973
    %v991 = vmul.f32 %v980, %v973
    %v992 = vmul.f32 %v984, %v973
    %v993 = vmul.f32 %v988, %v973
    %v994 = vadd.f32 %v931, %v990
    %v995 = vadd.f32 %v932, %v991
    %v996 = vadd.f32 %v933, %v992
    %v997 = vadd.f32 %v934, %v993
    %v998 = vmul.f32 %v973, %v973
    %v999 = vsub.f32 1.0, %v998
    %v1000 = vstv %s84
    %v1001 = vmul.f32 %v1000, %v999
    %v1002 = vadd.f32 %v1001, 1.0
    %v1003 = vand.u32 2147483647, %v1002
    %v1004 = vadd.f32 %v1003, 1e-15
    %v1005 = vmul.f32 %v941, %v1004
    %v1006 = vlog2.pop %v1005
    %v1007 = vmul.f32 %v1006, 0.6931472
    %v1008 = vadd.f32 %v878, %v1007
    %1009 = vset.pattern.permute.xlu0 14
    %1010 = vperm.xlu0 %1009, %v47
    %v1011 = vpop.permute.xlu0 %1010
    %1013 = vset.pattern.permute.xlu0 14
    %1014 = vperm.xlu0 %1013, %v48
    %v1015 = vpop.permute.xlu0 %1014
    %1017 = vset.pattern.permute.xlu0 14
    %1018 = vperm.xlu0 %1017, %v49
    %v1019 = vpop.permute.xlu0 %1018
    %1021 = vset.pattern.permute.xlu0 14
    %1022 = vperm.xlu0 %1021, %v50
    %v1023 = vpop.permute.xlu0 %1022
    %v1025 = vmul.f32 %v994, %v1011
    %v1026 = vmul.f32 %v995, %v1015
    %v1027 = vmul.f32 %v996, %v1019
    %v1028 = vmul.f32 %v997, %v1023
    %v1029 = vadd.f32 %v1025, %v1026
    %v1030 = vadd.f32 %v1029, %v1027
    %v1031 = vadd.f32 %v1030, %v1028
    %v1032 = vrot.slane %v1031, 4
    %v1033 = vadd.f32 %v1031, %v1032
    %v1034 = vrot.slane %v1033, 2
    %v1035 = vadd.f32 %v1033, %v1034
    %v1036 = vrot.slane %v1035, 1
    %v1037 = vadd.f32 %v1035, %v1036
    %v1038 = vstv %s69
    %v1039 = vadd.f32 %v1037, %v1038
    %v1040 = vtanh.pop %v1039
    %1041 = vset.pattern.permute.xlu0 14
    %1042 = vperm.xlu0 %1041, %v51
    %v1043 = vpop.permute.xlu0 %1042
    %1045 = vset.pattern.permute.xlu0 14
    %1046 = vperm.xlu0 %1045, %v52
    %v1047 = vpop.permute.xlu0 %1046
    %1049 = vset.pattern.permute.xlu0 14
    %1050 = vperm.xlu0 %1049, %v53
    %v1051 = vpop.permute.xlu0 %1050
    %1053 = vset.pattern.permute.xlu0 14
    %1054 = vperm.xlu0 %1053, %v54
    %v1055 = vpop.permute.xlu0 %1054
    %v1057 = vmul.f32 %v1043, %v1040
    %v1058 = vmul.f32 %v1047, %v1040
    %v1059 = vmul.f32 %v1051, %v1040
    %v1060 = vmul.f32 %v1055, %v1040
    %v1061 = vadd.f32 %v994, %v1057
    %v1062 = vadd.f32 %v995, %v1058
    %v1063 = vadd.f32 %v996, %v1059
    %v1064 = vadd.f32 %v997, %v1060
    %v1065 = vmul.f32 %v1040, %v1040
    %v1066 = vsub.f32 1.0, %v1065
    %v1067 = vstv %s85
    %v1068 = vmul.f32 %v1067, %v1066
    %v1069 = vadd.f32 %v1068, 1.0
    %v1070 = vand.u32 2147483647, %v1069
    %v1071 = vadd.f32 %v1070, 1e-15
    %1072 = vset.pattern.permute.xlu0 15
    %1073 = vperm.xlu0 %1072, %v47
    %v1074 = vpop.permute.xlu0 %1073
    %1076 = vset.pattern.permute.xlu0 15
    %1077 = vperm.xlu0 %1076, %v48
    %v1078 = vpop.permute.xlu0 %1077
    %1080 = vset.pattern.permute.xlu0 15
    %1081 = vperm.xlu0 %1080, %v49
    %v1082 = vpop.permute.xlu0 %1081
    %1084 = vset.pattern.permute.xlu0 15
    %1085 = vperm.xlu0 %1084, %v50
    %v1086 = vpop.permute.xlu0 %1085
    %v1088 = vmul.f32 %v1061, %v1074
    %v1089 = vmul.f32 %v1062, %v1078
    %v1090 = vmul.f32 %v1063, %v1082
    %v1091 = vmul.f32 %v1064, %v1086
    %v1092 = vadd.f32 %v1088, %v1089
    %v1093 = vadd.f32 %v1092, %v1090
    %v1094 = vadd.f32 %v1093, %v1091
    %v1095 = vrot.slane %v1094, 4
    %v1096 = vadd.f32 %v1094, %v1095
    %v1097 = vrot.slane %v1096, 2
    %v1098 = vadd.f32 %v1096, %v1097
    %v1099 = vrot.slane %v1098, 1
    %v1100 = vadd.f32 %v1098, %v1099
    %v1101 = vstv %s70
    %v1102 = vadd.f32 %v1100, %v1101
    %v1103 = vtanh.pop %v1102
    %1104 = vset.pattern.permute.xlu0 15
    %1105 = vperm.xlu0 %1104, %v51
    %v1106 = vpop.permute.xlu0 %1105
    %1108 = vset.pattern.permute.xlu0 15
    %1109 = vperm.xlu0 %1108, %v52
    %v1110 = vpop.permute.xlu0 %1109
    %1112 = vset.pattern.permute.xlu0 15
    %1113 = vperm.xlu0 %1112, %v53
    %v1114 = vpop.permute.xlu0 %1113
    %1116 = vset.pattern.permute.xlu0 15
    %1117 = vperm.xlu0 %1116, %v54
    %v1118 = vpop.permute.xlu0 %1117
    %v1120 = vmul.f32 %v1106, %v1103
    %v1121 = vmul.f32 %v1110, %v1103
    %v1122 = vmul.f32 %v1114, %v1103
    %v1123 = vmul.f32 %v1118, %v1103
    %v1124 = vadd.f32 %v1061, %v1120
    %v1125 = vadd.f32 %v1062, %v1121
    %v1126 = vadd.f32 %v1063, %v1122
    %v1127 = vadd.f32 %v1064, %v1123
    %v1128 = vmul.f32 %v1103, %v1103
    %v1129 = vsub.f32 1.0, %v1128
    %v1130 = vstv %s86
    %v1131 = vmul.f32 %v1130, %v1129
    %v1132 = vadd.f32 %v1131, 1.0
    %v1133 = vand.u32 2147483647, %v1132
    %v1134 = vadd.f32 %v1133, 1e-15
    %v1135 = vmul.f32 %v1071, %v1134
    %v1136 = vlog2.pop %v1135
    %v1137 = vmul.f32 %v1136, 0.6931472
    %v1138 = vadd.f32 %v1008, %v1137
    %1139 = vst [vmem:[%s5] sm:$0xff] %v1124
    %1140 = vst [vmem:[%s5 + $0x8] sm:$0xff] %v1125
    %1141 = vst [vmem:[%s5 + $0x10] sm:$0xff] %v1126
    %1142 = vst [vmem:[%s5 + $0x18] sm:$0xff] %v1127
    %1143 = vst [vmem:[%s6] sm:$0x1] %v1138
    // Predicated region
    $region30: #{layered_planar_flow.1} parent=1 // pred_check
      _
    $region31: #{layered_planar_flow.1} parent=1 // pred_check_branch
      %1145 = sbr.rel (0) target = $region33
    $region32: #{layered_planar_flow.1} parent=1 // pred_region
      _
    $region33: #{layered_planar_flow.1} parent=1 // pred_fallthru
      _
    // Predicated region
    $region34: #{layered_planar_flow.1} parent=1 // pred_check
      _
    $region35: #{layered_planar_flow.1} parent=1 // pred_check_branch
      %1147 = sbr.rel (0) target = $region37
    $region36: #{layered_planar_flow.1} parent=1 // pred_region
      _
    $region37: #{layered_planar_flow.1} parent=1 // pred_fallthru
      _
    // Predicated region
    $region38: #{layered_planar_flow.1} parent=1 // pred_check
      _
    $region39: #{layered_planar_flow.1} parent=1 // pred_check_branch
      %1149 = sbr.rel (0) target = $region41
    $region40: #{layered_planar_flow.1} parent=1 // pred_region
      _
    $region41: #{layered_planar_flow.1} parent=1 // pred_fallthru
      _
    // Predicated region
    $region42: #{layered_planar_flow.1} parent=1 // pred_check
      _
    $region43: #{layered_planar_flow.1} parent=1 // pred_check_branch
      %1151 = sbr.rel (0) target = $region45
    $region44: #{layered_planar_flow.1} parent=1 // pred_region
      _
    $region45: #{layered_planar_flow.1} parent=1 // pred_fallthru
      _
    %1152 = vsyncpa [#allocation3], 1
    %1153 = vsyncpa [#allocation5], 1

</llo_original>
